<compile_context>
chip_gen: v7x
topology: tpu7x:2x2x1
jax: 0.10.0
libtpu: 0.0.40
codegen_flags: <defaults>
</compile_context>

<pallas_src>
import math

import jax
import jax.numpy as jnp
from jax import lax
from jax.experimental import pallas as pl
from jax.experimental.pallas import tpu as pltpu

# ----- model hyper-params (small, consistent with the module) -----
C1 = 32          # embed dim c1
CM = 64          # ffn hidden dim cm
NUM_HEADS = 4
HEAD_DIM = C1 // NUM_HEADS
LN_EPS = 1e-5
B = 2            # batch
S = 8            # sequence length


def _layer_norm(x, w, b):
    mean = jnp.mean(x, axis=-1, keepdims=True)
    var = jnp.mean(jnp.square(x - mean), axis=-1, keepdims=True)
    return (x - mean) * lax.rsqrt(var + LN_EPS) * w + b


def _gelu_exact(x):
    # nn.GELU() default is the exact erf-based GELU
    return 0.5 * x * (1.0 + lax.erf(x * (1.0 / math.sqrt(2.0))))


def encoder_layer_kernel(src_ref, pos_ref, w_in_ref, w_out_ref,
                         w_fc1_ref, w_fc2_ref, vec_ref, out_ref):
    f32 = jnp.float32
    bs = src_ref.shape[0]          # rows in this block = bb * S
    bb = bs // S                   # batch elements handled this grid step

    # ---- unpack the single small-parameter operand (static 2-D slices) ----
    b_qk = vec_ref[0:1, 0:2 * C1]          # (1, 64)  [bq*scale | bk]
    b_v = vec_ref[0:1, 2 * C1:3 * C1]      # (1, 32)
    bo = vec_ref[1:2, 0:C1]
    b1 = vec_ref[2:3, 0:CM]
    b2 = vec_ref[3:4, 0:C1]
    ln1w = vec_ref[4:5, 0:C1]
    ln1b = vec_ref[5:6, 0:C1]
    ln2w = vec_ref[6:7, 0:C1]
    ln2b = vec_ref[7:8, 0:C1]

    x2d = src_ref[...].astype(f32)                 # (bs, C) value / residual
    xp2d = x2d + pos_ref[...].astype(f32)          # q = k = src + pos

    # ---- fused lane-wide projections (scale folded into q weight/bias) ----
    qk = jnp.dot(xp2d, w_in_ref[:, 0:2 * C1],
                 preferred_element_type=f32) + b_qk                 # (bs, 2C)
    v2d = jnp.dot(x2d, w_in_ref[:, 2 * C1:3 * C1],
                  preferred_element_type=f32) + b_v                 # (bs, C)

    # ---- static head/batch split -> (n = H*bb, S, dh) batched tensors ----
    def split_heads(t2d, col0):
        parts = []
        for h in range(NUM_HEADS):
            c0 = col0 + h * HEAD_DIM
            for b in range(bb):                    # n = h*bb + b
                parts.append(t2d[b * S:(b + 1) * S, c0:c0 + HEAD_DIM])
        return jnp.stack(parts, axis=0)            # (H*bb, S, dh)

    q_n = split_heads(qk, 0)
    k_n = split_heads(qk, C1)
    v_n = split_heads(v2d, 0)

    # ---- attention: one softmax over all (head, batch) pairs ----
    s = jnp.einsum('nqd,nkd->nqk', q_n, k_n,
                   preferred_element_type=f32)                      # (n, S, S)
    s = s - jnp.max(s, axis=-1, keepdims=True)
    p = jnp.exp(s)
    p = p * pl.reciprocal(jnp.sum(p, axis=-1, keepdims=True), approx=True)
    o_n = jnp.einsum('nqk,nkd->nqd', p, v_n,
                     preferred_element_type=f32)                    # (n, S, dh)

    # ---- out-projection: H accumulated (bs, dh) @ (dh, C) matmuls ----
    attn = None
    for h in range(NUM_HEADS):
        o_h = jnp.concatenate([o_n[h * bb + b] for b in range(bb)],
                              axis=0)                               # (bs, dh)
        part = jnp.dot(o_h, w_out_ref[h * HEAD_DIM:(h + 1) * HEAD_DIM, :],
                       preferred_element_type=f32)                  # (bs, C)
        attn = part if attn is None else attn + part
    attn = attn + bo

    # ---- src = norm1(src + attn) ----
    x1 = _layer_norm(x2d + attn, ln1w, ln1b)

    # ---- FFN: two plain 2-D matmuls, un-replicated pre-transposed weights ----
    h1 = _gelu_exact(jnp.dot(x1, w_fc1_ref[...],
                             preferred_element_type=f32) + b1)       # (bs, CM)
    h2 = jnp.dot(h1, w_fc2_ref[...], preferred_element_type=f32) + b2

    # ---- src = norm2(src + src2) ----
    x2 = _layer_norm(x1 + h2, ln2w, ln2b)
    out_ref[...] = x2.astype(out_ref.dtype)


def _prepare_weights(params):
    """Convert PyTorch-convention params into kernel layouts (host side).

    All transposes, scale folding and small-vector packing happen here so the
    kernel does no transposes and sees only 7 operands total.
    """
    f32 = jnp.float32
    wq, wk, wv = jnp.split(params["wqkv"].astype(f32), 3, axis=0)   # (C, C)
    bq, bk, bv = jnp.split(params["bqkv"].astype(f32)[0], 3)        # (C,)
    scale = 1.0 / math.sqrt(HEAD_DIM)

    # packed, pre-transposed in-projection: [Wq^T*scale | Wk^T | Wv^T]
    w_in = jnp.concatenate([wq.T * scale, wk.T, wv.T], axis=1)      # (C, 3C)
    w_out = params["wo"].astype(f32).T                              # (C, C)
    w_fc1 = params["w1"].astype(f32).T                              # (C, CM)
    w_fc2 = params["w2"].astype(f32).T                              # (CM, C)

    # all small vectors packed into one (8, 128) operand (single DMA)
    vec = jnp.zeros((8, 128), f32)
    vec = vec.at[0, 0:C1].set(bq * scale)
    vec = vec.at[0, C1:2 * C1].set(bk)
    vec = vec.at[0, 2 * C1:3 * C1].set(bv)
    vec = vec.at[1, 0:C1].set(params["bo"].astype(f32)[0])
    vec = vec.at[2, 0:CM].set(params["b1"].astype(f32)[0])
    vec = vec.at[3, 0:C1].set(params["b2"].astype(f32)[0])
    vec = vec.at[4, 0:C1].set(params["ln1w"].astype(f32)[0])
    vec = vec.at[5, 0:C1].set(params["ln1b"].astype(f32)[0])
    vec = vec.at[6, 0:C1].set(params["ln2w"].astype(f32)[0])
    vec = vec.at[7, 0:C1].set(params["ln2b"].astype(f32)[0])
    return [w_in, w_out, w_fc1, w_fc2, vec]


def transformer_encoder_layer(src, pos, params, *, batch_block=None):
    b, s, c = src.shape
    assert c == C1 and s == S
    # Default: one merged grid step (the kernel is latency/overhead-bound; the
    # extra per-step overhead of splitting outweighs the 2-core win at this
    # size).  Pass batch_block=1 to shard one sequence per TensorCore on
    # multi-core parts (v7x) after benchmarking.
    bb = b if batch_block is None else batch_block
    assert b % bb == 0
    weights = _prepare_weights(params)

    # activations flattened to 2-D outside the kernel (free metadata reshape)
    src2d = src.reshape(b * s, c)
    pos2d = pos.reshape(b * s, c)

    seq_spec = pl.BlockSpec((bb * s, c), lambda i: (i, 0))

    def full_spec(shape):
        nd = len(shape)
        return pl.BlockSpec(shape, lambda i, nd=nd: (0,) * nd)

    in_specs = [seq_spec, seq_spec] + [full_spec(w.shape) for w in weights]

    out2d = pl.pallas_call(
        encoder_layer_kernel,
        out_shape=jax.ShapeDtypeStruct((b * s, c), src.dtype),
        grid_spec=pltpu.PrefetchScalarGridSpec(
            num_scalar_prefetch=0,
            grid=(b // bb,),
            in_specs=in_specs,
            out_specs=seq_spec,
        ),
        compiler_params=pltpu.CompilerParams(
            dimension_semantics=("parallel",)),
    )(src2d, pos2d, *weights)
    return out2d.reshape(b, s, c)


def reference(src, pos, prm):
    """Pure-JAX reference of TransformerEncoderLayer.forward_post."""
    x = src.astype(jnp.float32)
    xp = x + pos.astype(jnp.float32)
    wq, wk, wv = jnp.split(prm["wqkv"], 3, axis=0)
    bq, bk, bv = jnp.split(prm["bqkv"][0], 3)
    q = xp @ wq.T + bq
    k = xp @ wk.T + bk
    v = x @ wv.T + bv
    bsz, seq, c = x.shape
    qh = q.reshape(bsz, seq, NUM_HEADS, HEAD_DIM)
    kh = k.reshape(bsz, seq, NUM_HEADS, HEAD_DIM)
    vh = v.reshape(bsz, seq, NUM_HEADS, HEAD_DIM)
    s = jnp.einsum("bqhd,bkhd->bhqk", qh, kh) / math.sqrt(HEAD_DIM)
    p = jax.nn.softmax(s, axis=-1)
    o = jnp.einsum("bhqk,bkhd->bqhd", p, vh).reshape(bsz, seq, c)
    attn = o @ prm["wo"].T + prm["bo"][0]
    x1 = _layer_norm(x + attn, prm["ln1w"][0], prm["ln1b"][0])
    h = jax.nn.gelu(x1 @ prm["w1"].T + prm["b1"][0], approximate=False)
    h2 = h @ prm["w2"].T + prm["b2"][0]
    return _layer_norm(x1 + h2, prm["ln2w"][0], prm["ln2b"][0])


def init_params(key):
    ks = jax.random.split(key, 10)
    f32 = jnp.float32
    return {
        # MultiheadAttention packed in-projection (3*C1, C1) and bias
        "wqkv": 0.05 * jax.random.normal(ks[0], (3 * C1, C1), f32),
        "bqkv": 0.05 * jax.random.normal(ks[1], (1, 3 * C1), f32),
        # out_proj
        "wo": 0.05 * jax.random.normal(ks[2], (C1, C1), f32),
        "bo": 0.05 * jax.random.normal(ks[3], (1, C1), f32),
        # norm1 / norm2
        "ln1w": jnp.ones((1, C1), f32) + 0.01 * jax.random.normal(ks[4], (1, C1), f32),
        "ln1b": 0.01 * jax.random.normal(ks[5], (1, C1), f32),
        "ln2w": jnp.ones((1, C1), f32) + 0.01 * jax.random.normal(ks[6], (1, C1), f32),
        "ln2b": 0.01 * jax.random.normal(ks[7], (1, C1), f32),
        # fc1 / fc2
        "w1": 0.05 * jax.random.normal(ks[8], (CM, C1), f32),
        "b1": jnp.zeros((1, CM), f32),
        "w2": 0.05 * jax.random.normal(ks[9], (C1, CM), f32),
        "b2": jnp.zeros((1, C1), f32),
    }


if __name__ == "__main__":
    key = jax.random.PRNGKey(0)
    k_src, k_pos, k_prm = jax.random.split(key, 3)
    src = jax.random.normal(k_src, (B, S, C1), jnp.float32)
    pos = jax.random.normal(k_pos, (B, S, C1), jnp.float32)
    params = init_params(k_prm)

    out = jax.block_until_ready(transformer_encoder_layer(src, pos, params))
    ref = jax.block_until_ready(reference(src, pos, params))
    assert out.shape == (B, S, C1)
    max_err = float(jnp.max(jnp.abs(out - ref)))
    assert jnp.allclose(out, ref, rtol=2e-3, atol=2e-3), max_err
    print("KERNEL_OK")
</pallas_src>

<mosaic_0001>
module attributes {stable_mosaic.version = 11 : i64} {
  func.func @encoder_layer_kernel(%arg0: i32, %arg1: memref<16x32xf32, #tpu.memory_space<vmem>>, %arg2: memref<16x32xf32, #tpu.memory_space<vmem>>, %arg3: memref<32x96xf32, #tpu.memory_space<vmem>>, %arg4: memref<32x32xf32, #tpu.memory_space<vmem>>, %arg5: memref<32x64xf32, #tpu.memory_space<vmem>>, %arg6: memref<64x32xf32, #tpu.memory_space<vmem>>, %arg7: memref<8x128xf32, #tpu.memory_space<vmem>>, %arg8: memref<16x32xf32, #tpu.memory_space<vmem>>) attributes {dimension_semantics = [#tpu.dimension_semantics<parallel>], iteration_bounds = array<i64: 1>, scalar_prefetch = 0 : i64, scratch_operands = 0 : i64, tpu.core_type = #tpu.core_type<tc>, window_params = [{transform_indices = @transform_0, window_bounds = array<i64: 16, 32>}, {transform_indices = @transform_1, window_bounds = array<i64: 16, 32>}, {pipeline_mode = #tpu.pipeline_mode<synchronous>, transform_indices = @transform_2, window_bounds = array<i64: 32, 96>}, {pipeline_mode = #tpu.pipeline_mode<synchronous>, transform_indices = @transform_3, window_bounds = array<i64: 32, 32>}, {pipeline_mode = #tpu.pipeline_mode<synchronous>, transform_indices = @transform_4, window_bounds = array<i64: 32, 64>}, {pipeline_mode = #tpu.pipeline_mode<synchronous>, transform_indices = @transform_5, window_bounds = array<i64: 64, 32>}, {pipeline_mode = #tpu.pipeline_mode<synchronous>, transform_indices = @transform_6, window_bounds = array<i64: 8, 128>}, {transform_indices = @transform_7, window_bounds = array<i64: 16, 32>}]} {
    %c0 = arith.constant 0 : index
    %c0_0 = arith.constant 0 : index
    %0 = vector.load %arg7[%c0, %c0_0] : memref<8x128xf32, #tpu.memory_space<vmem>>, vector<1x64xf32>
    %c0_1 = arith.constant 0 : index
    %c64 = arith.constant 64 : index
    %1 = vector.load %arg7[%c0_1, %c64] : memref<8x128xf32, #tpu.memory_space<vmem>>, vector<1x32xf32>
    %c1 = arith.constant 1 : index
    %c0_2 = arith.constant 0 : index
    %2 = vector.load %arg7[%c1, %c0_2] : memref<8x128xf32, #tpu.memory_space<vmem>>, vector<1x32xf32>
    %c2 = arith.constant 2 : index
    %c0_3 = arith.constant 0 : index
    %3 = vector.load %arg7[%c2, %c0_3] : memref<8x128xf32, #tpu.memory_space<vmem>>, vector<1x64xf32>
    %c3 = arith.constant 3 : index
    %c0_4 = arith.constant 0 : index
    %4 = vector.load %arg7[%c3, %c0_4] : memref<8x128xf32, #tpu.memory_space<vmem>>, vector<1x32xf32>
    %c4 = arith.constant 4 : index
    %c0_5 = arith.constant 0 : index
    %5 = vector.load %arg7[%c4, %c0_5] : memref<8x128xf32, #tpu.memory_space<vmem>>, vector<1x32xf32>
    %c5 = arith.constant 5 : index
    %c0_6 = arith.constant 0 : index
    %6 = vector.load %arg7[%c5, %c0_6] : memref<8x128xf32, #tpu.memory_space<vmem>>, vector<1x32xf32>
    %c6 = arith.constant 6 : index
    %c0_7 = arith.constant 0 : index
    %7 = vector.load %arg7[%c6, %c0_7] : memref<8x128xf32, #tpu.memory_space<vmem>>, vector<1x32xf32>
    %c7 = arith.constant 7 : index
    %c0_8 = arith.constant 0 : index
    %8 = vector.load %arg7[%c7, %c0_8] : memref<8x128xf32, #tpu.memory_space<vmem>>, vector<1x32xf32>
    %c0_9 = arith.constant 0 : index
    %c0_10 = arith.constant 0 : index
    %9 = vector.load %arg1[%c0_9, %c0_10] : memref<16x32xf32, #tpu.memory_space<vmem>>, vector<16x32xf32>
    %c0_11 = arith.constant 0 : index
    %c0_12 = arith.constant 0 : index
    %10 = vector.load %arg2[%c0_11, %c0_12] : memref<16x32xf32, #tpu.memory_space<vmem>>, vector<16x32xf32>
    %11 = arith.addf %9, %10 : vector<16x32xf32>
    %c0_13 = arith.constant 0 : index
    %c0_14 = arith.constant 0 : index
    %12 = vector.load %arg3[%c0_13, %c0_14] : memref<32x96xf32, #tpu.memory_space<vmem>>, vector<32x64xf32>
    %cst = arith.constant dense<0.000000e+00> : vector<16x64xf32>
    %13 = tpu.matmul %11, %12, %cst {dimension_numbers = #tpu.dot_dimension_numbers<[1], [0], [0], [1], [0, 0, 1, 1], [], []>} : vector<16x32xf32>, vector<32x64xf32>, vector<16x64xf32> -> vector<16x64xf32>
    %14 = vector.broadcast %0 : vector<1x64xf32> to vector<16x64xf32>
    %15 = arith.addf %13, %14 : vector<16x64xf32>
    %c0_15 = arith.constant 0 : index
    %c64_16 = arith.constant 64 : index
    %16 = vector.load %arg3[%c0_15, %c64_16] : memref<32x96xf32, #tpu.memory_space<vmem>>, vector<32x32xf32>
    %cst_17 = arith.constant dense<0.000000e+00> : vector<16x32xf32>
    %17 = tpu.matmul %9, %16, %cst_17 {dimension_numbers = #tpu.dot_dimension_numbers<[1], [0], [0], [1], [0, 0, 1, 1], [], []>} : vector<16x32xf32>, vector<32x32xf32>, vector<16x32xf32> -> vector<16x32xf32>
    %18 = vector.broadcast %1 : vector<1x32xf32> to vector<16x32xf32>
    %19 = arith.addf %17, %18 : vector<16x32xf32>
    %20 = vector.extract_strided_slice %15 {offsets = [0, 0], sizes = [8, 8], strides = [1, 1]} : vector<16x64xf32> to vector<8x8xf32>
    %21 = vector.extract_strided_slice %15 {offsets = [8, 0], sizes = [8, 8], strides = [1, 1]} : vector<16x64xf32> to vector<8x8xf32>
    %22 = vector.extract_strided_slice %15 {offsets = [0, 8], sizes = [8, 8], strides = [1, 1]} : vector<16x64xf32> to vector<8x8xf32>
    %23 = vector.extract_strided_slice %15 {offsets = [8, 8], sizes = [8, 8], strides = [1, 1]} : vector<16x64xf32> to vector<8x8xf32>
    %24 = vector.extract_strided_slice %15 {offsets = [0, 16], sizes = [8, 8], strides = [1, 1]} : vector<16x64xf32> to vector<8x8xf32>
    %25 = vector.extract_strided_slice %15 {offsets = [8, 16], sizes = [8, 8], strides = [1, 1]} : vector<16x64xf32> to vector<8x8xf32>
    %26 = vector.extract_strided_slice %15 {offsets = [0, 24], sizes = [8, 8], strides = [1, 1]} : vector<16x64xf32> to vector<8x8xf32>
    %27 = vector.extract_strided_slice %15 {offsets = [8, 24], sizes = [8, 8], strides = [1, 1]} : vector<16x64xf32> to vector<8x8xf32>
    %28 = vector.shape_cast %20 : vector<8x8xf32> to vector<1x8x8xf32>
    %29 = vector.shape_cast %21 : vector<8x8xf32> to vector<1x8x8xf32>
    %30 = vector.shape_cast %22 : vector<8x8xf32> to vector<1x8x8xf32>
    %31 = vector.shape_cast %23 : vector<8x8xf32> to vector<1x8x8xf32>
    %32 = vector.shape_cast %24 : vector<8x8xf32> to vector<1x8x8xf32>
    %33 = vector.shape_cast %25 : vector<8x8xf32> to vector<1x8x8xf32>
    %34 = vector.shape_cast %26 : vector<8x8xf32> to vector<1x8x8xf32>
    %35 = vector.shape_cast %27 : vector<8x8xf32> to vector<1x8x8xf32>
    %36 = tpu.concatenate %28, %29, %30, %31, %32, %33, %34, %35 in 0 : vector<1x8x8xf32>, vector<1x8x8xf32>, vector<1x8x8xf32>, vector<1x8x8xf32>, vector<1x8x8xf32>, vector<1x8x8xf32>, vector<1x8x8xf32>, vector<1x8x8xf32> -> vector<8x8x8xf32>
    %37 = vector.extract_strided_slice %15 {offsets = [0, 32], sizes = [8, 8], strides = [1, 1]} : vector<16x64xf32> to vector<8x8xf32>
    %38 = vector.extract_strided_slice %15 {offsets = [8, 32], sizes = [8, 8], strides = [1, 1]} : vector<16x64xf32> to vector<8x8xf32>
    %39 = vector.extract_strided_slice %15 {offsets = [0, 40], sizes = [8, 8], strides = [1, 1]} : vector<16x64xf32> to vector<8x8xf32>
    %40 = vector.extract_strided_slice %15 {offsets = [8, 40], sizes = [8, 8], strides = [1, 1]} : vector<16x64xf32> to vector<8x8xf32>
    %41 = vector.extract_strided_slice %15 {offsets = [0, 48], sizes = [8, 8], strides = [1, 1]} : vector<16x64xf32> to vector<8x8xf32>
    %42 = vector.extract_strided_slice %15 {offsets = [8, 48], sizes = [8, 8], strides = [1, 1]} : vector<16x64xf32> to vector<8x8xf32>
    %43 = vector.extract_strided_slice %15 {offsets = [0, 56], sizes = [8, 8], strides = [1, 1]} : vector<16x64xf32> to vector<8x8xf32>
    %44 = vector.extract_strided_slice %15 {offsets = [8, 56], sizes = [8, 8], strides = [1, 1]} : vector<16x64xf32> to vector<8x8xf32>
    %45 = vector.shape_cast %37 : vector<8x8xf32> to vector<1x8x8xf32>
    %46 = vector.shape_cast %38 : vector<8x8xf32> to vector<1x8x8xf32>
    %47 = vector.shape_cast %39 : vector<8x8xf32> to vector<1x8x8xf32>
    %48 = vector.shape_cast %40 : vector<8x8xf32> to vector<1x8x8xf32>
    %49 = vector.shape_cast %41 : vector<8x8xf32> to vector<1x8x8xf32>
    %50 = vector.shape_cast %42 : vector<8x8xf32> to vector<1x8x8xf32>
    %51 = vector.shape_cast %43 : vector<8x8xf32> to vector<1x8x8xf32>
    %52 = vector.shape_cast %44 : vector<8x8xf32> to vector<1x8x8xf32>
    %53 = tpu.concatenate %45, %46, %47, %48, %49, %50, %51, %52 in 0 : vector<1x8x8xf32>, vector<1x8x8xf32>, vector<1x8x8xf32>, vector<1x8x8xf32>, vector<1x8x8xf32>, vector<1x8x8xf32>, vector<1x8x8xf32>, vector<1x8x8xf32> -> vector<8x8x8xf32>
    %54 = vector.extract_strided_slice %19 {offsets = [0, 0], sizes = [8, 8], strides = [1, 1]} : vector<16x32xf32> to vector<8x8xf32>
    %55 = vector.extract_strided_slice %19 {offsets = [8, 0], sizes = [8, 8], strides = [1, 1]} : vector<16x32xf32> to vector<8x8xf32>
    %56 = vector.extract_strided_slice %19 {offsets = [0, 8], sizes = [8, 8], strides = [1, 1]} : vector<16x32xf32> to vector<8x8xf32>
    %57 = vector.extract_strided_slice %19 {offsets = [8, 8], sizes = [8, 8], strides = [1, 1]} : vector<16x32xf32> to vector<8x8xf32>
    %58 = vector.extract_strided_slice %19 {offsets = [0, 16], sizes = [8, 8], strides = [1, 1]} : vector<16x32xf32> to vector<8x8xf32>
    %59 = vector.extract_strided_slice %19 {offsets = [8, 16], sizes = [8, 8], strides = [1, 1]} : vector<16x32xf32> to vector<8x8xf32>
    %60 = vector.extract_strided_slice %19 {offsets = [0, 24], sizes = [8, 8], strides = [1, 1]} : vector<16x32xf32> to vector<8x8xf32>
    %61 = vector.extract_strided_slice %19 {offsets = [8, 24], sizes = [8, 8], strides = [1, 1]} : vector<16x32xf32> to vector<8x8xf32>
    %62 = vector.shape_cast %54 : vector<8x8xf32> to vector<1x8x8xf32>
    %63 = vector.shape_cast %55 : vector<8x8xf32> to vector<1x8x8xf32>
    %64 = vector.shape_cast %56 : vector<8x8xf32> to vector<1x8x8xf32>
    %65 = vector.shape_cast %57 : vector<8x8xf32> to vector<1x8x8xf32>
    %66 = vector.shape_cast %58 : vector<8x8xf32> to vector<1x8x8xf32>
    %67 = vector.shape_cast %59 : vector<8x8xf32> to vector<1x8x8xf32>
    %68 = vector.shape_cast %60 : vector<8x8xf32> to vector<1x8x8xf32>
    %69 = vector.shape_cast %61 : vector<8x8xf32> to vector<1x8x8xf32>
    %70 = tpu.concatenate %62, %63, %64, %65, %66, %67, %68, %69 in 0 : vector<1x8x8xf32>, vector<1x8x8xf32>, vector<1x8x8xf32>, vector<1x8x8xf32>, vector<1x8x8xf32>, vector<1x8x8xf32>, vector<1x8x8xf32>, vector<1x8x8xf32> -> vector<8x8x8xf32>
    "tpu.trace_start"() <{level = 10 : i32, message = "nqd,nkd->nqk"}> : () -> ()
    %cst_18 = arith.constant dense<0.000000e+00> : vector<8x8x8xf32>
    %71 = tpu.matmul %36, %53, %cst_18 {dimension_numbers = #tpu.dot_dimension_numbers<[2], [2], [1], [1], [0, 0, 0, 1, 1, 1], [0], [0]>} : vector<8x8x8xf32>, vector<8x8x8xf32>, vector<8x8x8xf32> -> vector<8x8x8xf32>
    "tpu.trace_stop"() : () -> ()
    %cst_19 = arith.constant dense<0xFF800000> : vector<8x8xf32>
    %72 = vector.multi_reduction <maximumf>, %71, %cst_19 [2] : vector<8x8x8xf32> to vector<8x8xf32>
    %73 = vector.shape_cast %72 : vector<8x8xf32> to vector<8x8x1xf32>
    %74 = vector.broadcast %73 : vector<8x8x1xf32> to vector<8x8x8xf32>
    %75 = arith.subf %71, %74 : vector<8x8x8xf32>
    %76 = math.exp %75 : vector<8x8x8xf32>
    %cst_20 = arith.constant dense<0.000000e+00> : vector<8x8xf32>
    %77 = vector.multi_reduction <add>, %76, %cst_20 [2] : vector<8x8x8xf32> to vector<8x8xf32>
    %78 = vector.shape_cast %77 : vector<8x8xf32> to vector<8x8x1xf32>
    %79 = tpu.reciprocal %78 {approx = true} : vector<8x8x1xf32> -> vector<8x8x1xf32>
    %80 = vector.broadcast %79 : vector<8x8x1xf32> to vector<8x8x8xf32>
    %81 = arith.mulf %76, %80 : vector<8x8x8xf32>
    "tpu.trace_start"() <{level = 10 : i32, message = "nqk,nkd->nqd"}> : () -> ()
    %cst_21 = arith.constant dense<0.000000e+00> : vector<8x8x8xf32>
    %82 = tpu.matmul %81, %70, %cst_21 {dimension_numbers = #tpu.dot_dimension_numbers<[2], [1], [1], [2], [0, 0, 0, 1, 1, 2], [0], [0]>} : vector<8x8x8xf32>, vector<8x8x8xf32>, vector<8x8x8xf32> -> vector<8x8x8xf32>
    "tpu.trace_stop"() : () -> ()
    %83 = vector.extract_strided_slice %82 {offsets = [0, 0, 0], sizes = [1, 8, 8], strides = [1, 1, 1]} : vector<8x8x8xf32> to vector<1x8x8xf32>
    %84 = vector.shape_cast %83 : vector<1x8x8xf32> to vector<8x8xf32>
    %85 = vector.extract_strided_slice %82 {offsets = [1, 0, 0], sizes = [1, 8, 8], strides = [1, 1, 1]} : vector<8x8x8xf32> to vector<1x8x8xf32>
    %86 = vector.shape_cast %85 : vector<1x8x8xf32> to vector<8x8xf32>
    %87 = tpu.concatenate %84, %86 in 0 : vector<8x8xf32>, vector<8x8xf32> -> vector<16x8xf32>
    %c0_22 = arith.constant 0 : index
    %c0_23 = arith.constant 0 : index
    %88 = vector.load %arg4[%c0_22, %c0_23] : memref<32x32xf32, #tpu.memory_space<vmem>>, vector<8x32xf32>
    %cst_24 = arith.constant dense<0.000000e+00> : vector<16x32xf32>
    %89 = tpu.matmul %87, %88, %cst_24 {dimension_numbers = #tpu.dot_dimension_numbers<[1], [0], [0], [1], [0, 0, 1, 1], [], []>} : vector<16x8xf32>, vector<8x32xf32>, vector<16x32xf32> -> vector<16x32xf32>
    %90 = vector.extract_strided_slice %82 {offsets = [2, 0, 0], sizes = [1, 8, 8], strides = [1, 1, 1]} : vector<8x8x8xf32> to vector<1x8x8xf32>
    %91 = vector.shape_cast %90 : vector<1x8x8xf32> to vector<8x8xf32>
    %92 = vector.extract_strided_slice %82 {offsets = [3, 0, 0], sizes = [1, 8, 8], strides = [1, 1, 1]} : vector<8x8x8xf32> to vector<1x8x8xf32>
    %93 = vector.shape_cast %92 : vector<1x8x8xf32> to vector<8x8xf32>
    %94 = tpu.concatenate %91, %93 in 0 : vector<8x8xf32>, vector<8x8xf32> -> vector<16x8xf32>
    %c8 = arith.constant 8 : index
    %c0_25 = arith.constant 0 : index
    %95 = vector.load %arg4[%c8, %c0_25] : memref<32x32xf32, #tpu.memory_space<vmem>>, vector<8x32xf32>
    %cst_26 = arith.constant dense<0.000000e+00> : vector<16x32xf32>
    %96 = tpu.matmul %94, %95, %cst_26 {dimension_numbers = #tpu.dot_dimension_numbers<[1], [0], [0], [1], [0, 0, 1, 1], [], []>} : vector<16x8xf32>, vector<8x32xf32>, vector<16x32xf32> -> vector<16x32xf32>
    %97 = arith.addf %89, %96 : vector<16x32xf32>
    %98 = vector.extract_strided_slice %82 {offsets = [4, 0, 0], sizes = [1, 8, 8], strides = [1, 1, 1]} : vector<8x8x8xf32> to vector<1x8x8xf32>
    %99 = vector.shape_cast %98 : vector<1x8x8xf32> to vector<8x8xf32>
    %100 = vector.extract_strided_slice %82 {offsets = [5, 0, 0], sizes = [1, 8, 8], strides = [1, 1, 1]} : vector<8x8x8xf32> to vector<1x8x8xf32>
    %101 = vector.shape_cast %100 : vector<1x8x8xf32> to vector<8x8xf32>
    %102 = tpu.concatenate %99, %101 in 0 : vector<8x8xf32>, vector<8x8xf32> -> vector<16x8xf32>
    %c16 = arith.constant 16 : index
    %c0_27 = arith.constant 0 : index
    %103 = vector.load %arg4[%c16, %c0_27] : memref<32x32xf32, #tpu.memory_space<vmem>>, vector<8x32xf32>
    %cst_28 = arith.constant dense<0.000000e+00> : vector<16x32xf32>
    %104 = tpu.matmul %102, %103, %cst_28 {dimension_numbers = #tpu.dot_dimension_numbers<[1], [0], [0], [1], [0, 0, 1, 1], [], []>} : vector<16x8xf32>, vector<8x32xf32>, vector<16x32xf32> -> vector<16x32xf32>
    %105 = arith.addf %97, %104 : vector<16x32xf32>
    %106 = vector.extract_strided_slice %82 {offsets = [6, 0, 0], sizes = [1, 8, 8], strides = [1, 1, 1]} : vector<8x8x8xf32> to vector<1x8x8xf32>
    %107 = vector.shape_cast %106 : vector<1x8x8xf32> to vector<8x8xf32>
    %108 = vector.extract_strided_slice %82 {offsets = [7, 0, 0], sizes = [1, 8, 8], strides = [1, 1, 1]} : vector<8x8x8xf32> to vector<1x8x8xf32>
    %109 = vector.shape_cast %108 : vector<1x8x8xf32> to vector<8x8xf32>
    %110 = tpu.concatenate %107, %109 in 0 : vector<8x8xf32>, vector<8x8xf32> -> vector<16x8xf32>
    %c24 = arith.constant 24 : index
    %c0_29 = arith.constant 0 : index
    %111 = vector.load %arg4[%c24, %c0_29] : memref<32x32xf32, #tpu.memory_space<vmem>>, vector<8x32xf32>
    %cst_30 = arith.constant dense<0.000000e+00> : vector<16x32xf32>
    %112 = tpu.matmul %110, %111, %cst_30 {dimension_numbers = #tpu.dot_dimension_numbers<[1], [0], [0], [1], [0, 0, 1, 1], [], []>} : vector<16x8xf32>, vector<8x32xf32>, vector<16x32xf32> -> vector<16x32xf32>
    %113 = arith.addf %105, %112 : vector<16x32xf32>
    %114 = vector.broadcast %2 : vector<1x32xf32> to vector<16x32xf32>
    %115 = arith.addf %113, %114 : vector<16x32xf32>
    %116 = arith.addf %9, %115 : vector<16x32xf32>
    %cst_31 = arith.constant dense<0.000000e+00> : vector<16xf32>
    %117 = vector.multi_reduction <add>, %116, %cst_31 [1] : vector<16x32xf32> to vector<16xf32>
    %118 = vector.shape_cast %117 : vector<16xf32> to vector<16x1xf32>
    %cst_32 = arith.constant 3.200000e+01 : f32
    %119 = vector.broadcast %cst_32 : f32 to vector<16x1xf32>
    %120 = arith.divf %118, %119 : vector<16x1xf32>
    %121 = vector.broadcast %120 : vector<16x1xf32> to vector<16x32xf32>
    %122 = arith.subf %116, %121 : vector<16x32xf32>
    %123 = arith.mulf %122, %122 : vector<16x32xf32>
    %cst_33 = arith.constant dense<0.000000e+00> : vector<16xf32>
    %124 = vector.multi_reduction <add>, %123, %cst_33 [1] : vector<16x32xf32> to vector<16xf32>
    %125 = vector.shape_cast %124 : vector<16xf32> to vector<16x1xf32>
    %cst_34 = arith.constant 3.200000e+01 : f32
    %126 = vector.broadcast %cst_34 : f32 to vector<16x1xf32>
    %127 = arith.divf %125, %126 : vector<16x1xf32>
    %128 = vector.broadcast %120 : vector<16x1xf32> to vector<16x32xf32>
    %129 = arith.subf %116, %128 : vector<16x32xf32>
    %cst_35 = arith.constant 9.99999974E-6 : f32
    %130 = vector.broadcast %cst_35 : f32 to vector<16x1xf32>
    %131 = arith.addf %127, %130 : vector<16x1xf32>
    %132 = math.rsqrt %131 : vector<16x1xf32>
    %133 = vector.broadcast %132 : vector<16x1xf32> to vector<16x32xf32>
    %134 = arith.mulf %129, %133 : vector<16x32xf32>
    %135 = vector.broadcast %5 : vector<1x32xf32> to vector<16x32xf32>
    %136 = arith.mulf %134, %135 : vector<16x32xf32>
    %137 = vector.broadcast %6 : vector<1x32xf32> to vector<16x32xf32>
    %138 = arith.addf %136, %137 : vector<16x32xf32>
    %c0_36 = arith.constant 0 : index
    %c0_37 = arith.constant 0 : index
    %139 = vector.load %arg5[%c0_36, %c0_37] : memref<32x64xf32, #tpu.memory_space<vmem>>, vector<32x64xf32>
    %cst_38 = arith.constant dense<0.000000e+00> : vector<16x64xf32>
    %140 = tpu.matmul %138, %139, %cst_38 {dimension_numbers = #tpu.dot_dimension_numbers<[1], [0], [0], [1], [0, 0, 1, 1], [], []>} : vector<16x32xf32>, vector<32x64xf32>, vector<16x64xf32> -> vector<16x64xf32>
    %141 = vector.broadcast %3 : vector<1x64xf32> to vector<16x64xf32>
    %142 = arith.addf %140, %141 : vector<16x64xf32>
    %cst_39 = arith.constant 5.000000e-01 : f32
    %143 = vector.broadcast %cst_39 : f32 to vector<16x64xf32>
    %144 = arith.mulf %143, %142 : vector<16x64xf32>
    %cst_40 = arith.constant 0.707106769 : f32
    %145 = vector.broadcast %cst_40 : f32 to vector<16x64xf32>
    %146 = arith.mulf %142, %145 : vector<16x64xf32>
    %147 = math.erf %146 : vector<16x64xf32>
    %cst_41 = arith.constant 1.000000e+00 : f32
    %148 = vector.broadcast %cst_41 : f32 to vector<16x64xf32>
    %149 = arith.addf %148, %147 : vector<16x64xf32>
    %150 = arith.mulf %144, %149 : vector<16x64xf32>
    %c0_42 = arith.constant 0 : index
    %c0_43 = arith.constant 0 : index
    %151 = vector.load %arg6[%c0_42, %c0_43] : memref<64x32xf32, #tpu.memory_space<vmem>>, vector<64x32xf32>
    %cst_44 = arith.constant dense<0.000000e+00> : vector<16x32xf32>
    %152 = tpu.matmul %150, %151, %cst_44 {dimension_numbers = #tpu.dot_dimension_numbers<[1], [0], [0], [1], [0, 0, 1, 1], [], []>} : vector<16x64xf32>, vector<64x32xf32>, vector<16x32xf32> -> vector<16x32xf32>
    %153 = vector.broadcast %4 : vector<1x32xf32> to vector<16x32xf32>
    %154 = arith.addf %152, %153 : vector<16x32xf32>
    %155 = arith.addf %138, %154 : vector<16x32xf32>
    %cst_45 = arith.constant dense<0.000000e+00> : vector<16xf32>
    %156 = vector.multi_reduction <add>, %155, %cst_45 [1] : vector<16x32xf32> to vector<16xf32>
    %157 = vector.shape_cast %156 : vector<16xf32> to vector<16x1xf32>
    %cst_46 = arith.constant 3.200000e+01 : f32
    %158 = vector.broadcast %cst_46 : f32 to vector<16x1xf32>
    %159 = arith.divf %157, %158 : vector<16x1xf32>
    %160 = vector.broadcast %159 : vector<16x1xf32> to vector<16x32xf32>
    %161 = arith.subf %155, %160 : vector<16x32xf32>
    %162 = arith.mulf %161, %161 : vector<16x32xf32>
    %cst_47 = arith.constant dense<0.000000e+00> : vector<16xf32>
    %163 = vector.multi_reduction <add>, %162, %cst_47 [1] : vector<16x32xf32> to vector<16xf32>
    %164 = vector.shape_cast %163 : vector<16xf32> to vector<16x1xf32>
    %cst_48 = arith.constant 3.200000e+01 : f32
    %165 = vector.broadcast %cst_48 : f32 to vector<16x1xf32>
    %166 = arith.divf %164, %165 : vector<16x1xf32>
    %167 = vector.broadcast %159 : vector<16x1xf32> to vector<16x32xf32>
    %168 = arith.subf %155, %167 : vector<16x32xf32>
    %cst_49 = arith.constant 9.99999974E-6 : f32
    %169 = vector.broadcast %cst_49 : f32 to vector<16x1xf32>
    %170 = arith.addf %166, %169 : vector<16x1xf32>
    %171 = math.rsqrt %170 : vector<16x1xf32>
    %172 = vector.broadcast %171 : vector<16x1xf32> to vector<16x32xf32>
    %173 = arith.mulf %168, %172 : vector<16x32xf32>
    %174 = vector.broadcast %7 : vector<1x32xf32> to vector<16x32xf32>
    %175 = arith.mulf %173, %174 : vector<16x32xf32>
    %176 = vector.broadcast %8 : vector<1x32xf32> to vector<16x32xf32>
    %177 = arith.addf %175, %176 : vector<16x32xf32>
    %c0_50 = arith.constant 0 : index
    %c0_51 = arith.constant 0 : index
    %178 = vector.load %arg8[%c0_50, %c0_51] : memref<16x32xf32, #tpu.memory_space<vmem>>, vector<16x32xf32>
    tpu.vector_store %arg8[%c0_50, %c0_51], %177 {strides = array<i32>} : memref<16x32xf32, #tpu.memory_space<vmem>>, vector<16x32xf32>,
    return
  }
  func.func @transform_0(%arg0: i32) -> (i32, i32) {
    %c0_i32 = arith.constant 0 : i32
    %c0_i32_0 = arith.constant 0 : i32
    return %arg0, %c0_i32 : i32, i32
  }
  func.func @transform_1(%arg0: i32) -> (i32, i32) {
    %c0_i32 = arith.constant 0 : i32
    %c0_i32_0 = arith.constant 0 : i32
    return %arg0, %c0_i32 : i32, i32
  }
  func.func @transform_2(%arg0: i32) -> (i32, i32) {
    %c0_i32 = arith.constant 0 : i32
    %c0_i32_0 = arith.constant 0 : i32
    %c0_i32_1 = arith.constant 0 : i32
    return %c0_i32, %c0_i32_0 : i32, i32
  }
  func.func @transform_3(%arg0: i32) -> (i32, i32) {
    %c0_i32 = arith.constant 0 : i32
    %c0_i32_0 = arith.constant 0 : i32
    %c0_i32_1 = arith.constant 0 : i32
    return %c0_i32, %c0_i32_0 : i32, i32
  }
  func.func @transform_4(%arg0: i32) -> (i32, i32) {
    %c0_i32 = arith.constant 0 : i32
    %c0_i32_0 = arith.constant 0 : i32
    %c0_i32_1 = arith.constant 0 : i32
    return %c0_i32, %c0_i32_0 : i32, i32
  }
  func.func @transform_5(%arg0: i32) -> (i32, i32) {
    %c0_i32 = arith.constant 0 : i32
    %c0_i32_0 = arith.constant 0 : i32
    %c0_i32_1 = arith.constant 0 : i32
    return %c0_i32, %c0_i32_0 : i32, i32
  }
  func.func @transform_6(%arg0: i32) -> (i32, i32) {
    %c0_i32 = arith.constant 0 : i32
    %c0_i32_0 = arith.constant 0 : i32
    %c0_i32_1 = arith.constant 0 : i32
    return %c0_i32, %c0_i32_0 : i32, i32
  }
  func.func @transform_7(%arg0: i32) -> (i32, i32) {
    %c0_i32 = arith.constant 0 : i32
    %c0_i32_0 = arith.constant 0 : i32
    return %arg0, %c0_i32 : i32, i32
  }
}

</mosaic_0001>

<llo_original>
// kernel: tpu_custom_call.1
$region0: #{tpu_custom_call.1}
  #allocation0 [shape = 'u32[]', space=smem, size = 0x4, offset = 0x4, fixed_abs, tag = 'smem constant byte address 0x4 - core index']
  #allocation1 [shape = 'u32[144,128]{1,0:T(1,128)}', space=vmem, size = 0x12000, scoped, tag = 'internal scratch']
  %s0 = inlined_call_operand.hbm [shape: f32[16,32], index: 0, kind: input, shape index: {}]
  %s1 = inlined_call_operand.hbm [shape: f32[16,32], index: 1, kind: input, shape index: {}]
  %s2 = inlined_call_operand.vmem [shape: f32[32,96], index: 2, kind: input, shape index: {}]
  %s3 = inlined_call_operand.vmem [shape: f32[32,32], index: 3, kind: input, shape index: {}]
  %s4 = inlined_call_operand.vmem [shape: f32[32,64], index: 4, kind: input, shape index: {}]
  %s5 = inlined_call_operand.vmem [shape: f32[64,32], index: 5, kind: input, shape index: {}]
  %s6 = inlined_call_operand.vmem [shape: f32[8,128], index: 6, kind: input, shape index: {}]
  %s7 = inlined_call_operand.hbm [shape: f32[16,32], index: 7, kind: output, shape index: {}]
  %s8 = sld [smem:[#allocation0]]
  $region46: #{tpu_custom_call.1} parent=0
    _
  %s10 = ssub.s32 1, %s8
  %s11 = scalar_select 0, %s10, %s8
  $region1: #{tpu_custom_call.1} parent=0
    #allocation2 [shape = 'u8[8192]{0}', space=vmem, size = 0x2000, scoped, tag = 'input window, operand 0, single buffered']
    #allocation3 [shape = 's32[1]{0}', space=sflag, size = 0x4, scoped, tag = 'scoped memory for tpu_custom_call.1']
    #allocation4 [shape = 's32[1]{0}', space=sflag, size = 0x4, scoped, tag = 'scoped memory for tpu_custom_call.1']
    #allocation5 [shape = 'u8[8192]{0}', space=vmem, size = 0x2000, scoped, tag = 'input window, operand 1, single buffered']
    #allocation6 [shape = 's32[1]{0}', space=sflag, size = 0x4, scoped, tag = 'scoped memory for tpu_custom_call.1']
    #allocation7 [shape = 'u8[8192]{0}', space=vmem, size = 0x2000, scoped, tag = 'output window, operand 0, single buffered']
    %12 = vsyncpa [#allocation3], 0
    %13 = vsyncpa [#allocation6], 0
    %14 = vsyncpa [#allocation4], 0
    // Predicated region
    $region2: #{tpu_custom_call.1} parent=1 // pred_check
      _
    $region3: #{tpu_custom_call.1} parent=1 // pred_check_branch
      %16 = sbr.rel (0) target = $region5
    $region4: #{tpu_custom_call.1} parent=1 // pred_region
      %s18 = ssub.s32 256, 256
      %19 = vsyncadd [#allocation3], %s18
      %s20 = sshll.u32 [#allocation2], 4
      %s21 = int_to_ptr.vmem [resolvable:$true] %s20
      %26 = dma.hbm_to_vmem [thread:$0]  %s0, 256, %s21, [#allocation3], 128, 128, 8
    $region5: #{tpu_custom_call.1} parent=1 // pred_fallthru
      _
    // Predicated region
    $region6: #{tpu_custom_call.1} parent=1 // pred_check
      _
    $region7: #{tpu_custom_call.1} parent=1 // pred_check_branch
      %28 = sbr.rel (0) target = $region9
    $region8: #{tpu_custom_call.1} parent=1 // pred_region
      %s30 = ssub.s32 256, 256
      %31 = vsyncadd [#allocation6], %s30
      %s32 = sshll.u32 [#allocation5], 4
      %s33 = int_to_ptr.vmem [resolvable:$true] %s32
      %38 = dma.hbm_to_vmem [thread:$0]  %s1, 256, %s33, [#allocation6], 128, 128, 8
    $region9: #{tpu_custom_call.1} parent=1 // pred_fallthru
      _
    // Predicated region
    $region10: #{tpu_custom_call.1} parent=1 // pred_check
      _
    $region11: #{tpu_custom_call.1} parent=1 // pred_check_branch
      %40 = sbr.rel (0) target = $region13
    $region12: #{tpu_custom_call.1} parent=1 // pred_region
      _
    $region13: #{tpu_custom_call.1} parent=1 // pred_fallthru
      _
    // Predicated region
    $region14: #{tpu_custom_call.1} parent=1 // pred_check
      _
    $region15: #{tpu_custom_call.1} parent=1 // pred_check_branch
      %42 = sbr.rel (0) target = $region17
    $region16: #{tpu_custom_call.1} parent=1 // pred_region
      _
    $region17: #{tpu_custom_call.1} parent=1 // pred_fallthru
      _
    // Predicated region
    $region18: #{tpu_custom_call.1} parent=1 // pred_check
      _
    $region19: #{tpu_custom_call.1} parent=1 // pred_check_branch
      %44 = sbr.rel (0) target = $region21
    $region20: #{tpu_custom_call.1} parent=1 // pred_region
      _
    $region21: #{tpu_custom_call.1} parent=1 // pred_fallthru
      _
    // Predicated region
    $region22: #{tpu_custom_call.1} parent=1 // pred_check
      _
    $region23: #{tpu_custom_call.1} parent=1 // pred_check_branch
      %46 = sbr.rel (0) target = $region25
    $region24: #{tpu_custom_call.1} parent=1 // pred_region
      _
    $region25: #{tpu_custom_call.1} parent=1 // pred_fallthru
      _
    // Predicated region
    $region26: #{tpu_custom_call.1} parent=1 // pred_check
      _
    $region27: #{tpu_custom_call.1} parent=1 // pred_check_branch
      %48 = sbr.rel (0) target = $region29
    $region28: #{tpu_custom_call.1} parent=1 // pred_region
      _
    $region29: #{tpu_custom_call.1} parent=1 // pred_fallthru
      _
    // Predicated region
    $region30: #{tpu_custom_call.1} parent=1 // pred_check
      _
    $region31: #{tpu_custom_call.1} parent=1 // pred_check_branch
      %50 = sbr.rel (0) target = $region33
    $region32: #{tpu_custom_call.1} parent=1 // pred_region
      %51 = dma.done [#allocation3], 256
    $region33: #{tpu_custom_call.1} parent=1 // pred_fallthru
      _
    // Predicated region
    $region34: #{tpu_custom_call.1} parent=1 // pred_check
      _
    $region35: #{tpu_custom_call.1} parent=1 // pred_check_branch
      %53 = sbr.rel (0) target = $region37
    $region36: #{tpu_custom_call.1} parent=1 // pred_region
      %54 = dma.done [#allocation6], 256
    $region37: #{tpu_custom_call.1} parent=1 // pred_fallthru
      _
    %v55 = vld [vmem:[%s6] sm:$0x1]
    %v56 = vld [vmem:[%s6 + $0x1] sm:$0x1]
    %v57 = vld [vmem:[%s6 + $0x2] sm:$0x1]
    %v58 = vld [vmem:[%s6 + $0x3] sm:$0x1]
    %v59 = vld [vmem:[%s6 + $0x4] sm:$0x1]
    %v60 = vld [vmem:[%s6 + $0x5] sm:$0x1]
    %v61 = vld [vmem:[%s6 + $0x6] sm:$0x1]
    %v62 = vld [vmem:[%s6 + $0x7] sm:$0x1]
    %v63 = vld [vmem:[#allocation2] sm:$0xff]
    %v64 = vld [vmem:[#allocation2 + $0x8] sm:$0xff]
    %v65 = vld [vmem:[#allocation5] sm:$0xff]
    %v66 = vld [vmem:[#allocation5 + $0x8] sm:$0xff]
    %v67 = vadd.f32 %v63, %v65
    %v68 = vadd.f32 %v64, %v66
    %v69 = vld [vmem:[%s2] sm:$0xff]
    %v70 = vld [vmem:[%s2 + $0x8] sm:$0xff]
    %v71 = vld [vmem:[%s2 + $0x10] sm:$0xff]
    %v72 = vld [vmem:[%s2 + $0x18] sm:$0xff]
    %v73 = vlaneseq
    %v74 = vshrl.u32 %v73, 7
    %v75 = vsub.s32 0, %v74
    %v76 = vrot.slane %v55, %v75
    %vm77 = vcmask 261120
    %v79 = vsel %vm77, %v67, 0
    %v82 = vsel %vm77, %v68, 0
    %84 = vmatprep.subr.mxu0 0.0
    %85 = vmatpush1.msra.mxu0 %v69
    %86 = vmatprep.subr.mxu0 0.0
    %87 = vmatpush1.msra.mxu0 %v70
    %88 = vmatprep.subr.mxu0 0.0
    %89 = vmatpush1.msra.mxu0 %v71
    %90 = vmatprep.subr.mxu0 0.0
    %91 = vmatpush1.msra.mxu0 %v72
    %92 = vmatprep.subr.mxu0 0.0
    %93 = vmatpush1.msra.mxu0 0.0
    %94 = vmatprep.subr.mxu0 0.0
    %95 = vmatpush1.msra.mxu0 0.0
    %96 = vmatprep.subr.mxu0 0.0
    %97 = vmatpush1.msra.mxu0 0.0
    %98 = vmatprep.subr.mxu0 0.0
    %99 = vmatpush1.msra.mxu0 0.0
    %100 = vmatprep.subr.mxu0 0.0
    %101 = vmatpush1.msra.mxu0 0.0
    %102 = vmatprep.subr.mxu0 0.0
    %103 = vmatpush1.msra.mxu0 0.0
    %104 = vmatprep.subr.mxu0 0.0
    %105 = vmatpush1.msra.mxu0 0.0
    %106 = vmatprep.subr.mxu0 0.0
    %107 = vmatpush1.msra.mxu0 0.0
    %108 = vmatprep.subr.mxu0 0.0
    %109 = vmatpush1.msra.mxu0 0.0
    %110 = vmatprep.subr.mxu0 0.0
    %111 = vmatpush1.msra.mxu0 0.0
    %112 = vmatprep.subr.mxu0 0.0
    %113 = vmatpush1.msra.mxu0 0.0
    %114 = vmatprep.subr.mxu0 0.0
    %115 = vmatpush1.msra.mxu0 0.0
    %116 = vmatprep.subr.mxu0 0.0
    %117 = vmatpush1.msra.mxu0 0.0
    %118 = vmatprep.subr.mxu0 0.0
    %119 = vmatpush1.msra.mxu0 0.0
    %120 = vmatprep.subr.mxu0 0.0
    %121 = vmatpush1.msra.mxu0 0.0
    %122 = vmatprep.subr.mxu0 0.0
    %123 = vmatpush1.msra.mxu0 0.0
    %124 = vmatprep.subr.mxu0 0.0
    %125 = vmatpush1.msra.mxu0 0.0
    %126 = vmatprep.subr.mxu0 0.0
    %127 = vmatpush1.msra.mxu0 0.0
    %128 = vmatprep.subr.mxu0 0.0
    %129 = vmatpush1.msra.mxu0 0.0
    %130 = vmatprep.subr.mxu0 0.0
    %131 = vmatpush1.msra.mxu0 0.0
    %132 = vmatprep.subr.mxu0 0.0
    %133 = vmatpush1.msra.mxu0 0.0
    %134 = vmatprep.subr.mxu0 0.0
    %135 = vmatpush1.msra.mxu0 0.0
    %136 = vmatprep.subr.mxu0 0.0
    %137 = vmatpush1.msra.mxu0 0.0
    %138 = vmatprep.subr.mxu0 0.0
    %139 = vmatpush1.msra.mxu0 0.0
    %140 = vmatprep.subr.mxu0 0.0
    %141 = vmatpush1.msra.mxu0 0.0
    %142 = vmatprep.subr.mxu0 0.0
    %143 = vmatpush1.msra.mxu0 0.0
    %144 = vmatprep.subr.mxu0 0.0
    %145 = vmatpush1.msra.mxu0 0.0
    %146 = vmatprep.subr.mxu0 0.0
    %147 = vmatpush1.msra.mxu0 0.0
    %148 = vmatprep.mubr.f32.mxu0 0.0
    %149 = vmatmul.mubr.f32.gmra.mrb[0].mxu0 %v79
    %v150 = vpop.f32.mrb[0].mxu0
    %v151 = vadd.f32 %v76, %v150
    %v152 = vpop.f32.mrb[0].mxu0
    %153 = vmatprep.mubr.f32.mxu0 0.0
    %154 = vmatmul.mubr.f32.gmra.mrb[0].mxu0 %v82
    %v155 = vpop.f32.mrb[0].mxu0
    %v156 = vadd.f32 %v76, %v155
    %v157 = vpop.f32.mrb[0].mxu0
    %158 = vdwg.mxu0
    %163 = vrot.lane.b32.xlu0 %v69, 64
    %v164 = vpop.permute.xlu0 %163
    %165 = vrot.lane.b32.xlu0 %v70, 64
    %v166 = vpop.permute.xlu0 %165
    %167 = vrot.lane.b32.xlu0 %v71, 64
    %v168 = vpop.permute.xlu0 %167
    %169 = vrot.lane.b32.xlu0 %v72, 64
    %v170 = vpop.permute.xlu0 %169
    %176 = vrot.lane.b32.xlu0 %v76, 64
    %v177 = vpop.permute.xlu0 %176
    %v180 = vsel %vm77, %v63, 0
    %v183 = vsel %vm77, %v64, 0
    %185 = vmatprep.subr.mxu0 0.0
    %186 = vmatpush1.msra.mxu0 %v164
    %187 = vmatprep.subr.mxu0 0.0
    %188 = vmatpush1.msra.mxu0 %v166
    %189 = vmatprep.subr.mxu0 0.0
    %190 = vmatpush1.msra.mxu0 %v168
    %191 = vmatprep.subr.mxu0 0.0
    %192 = vmatpush1.msra.mxu0 %v170
    %193 = vmatprep.subr.mxu0 0.0
    %194 = vmatpush1.msra.mxu0 0.0
    %195 = vmatprep.subr.mxu0 0.0
    %196 = vmatpush1.msra.mxu0 0.0
    %197 = vmatprep.subr.mxu0 0.0
    %198 = vmatpush1.msra.mxu0 0.0
    %199 = vmatprep.subr.mxu0 0.0
    %200 = vmatpush1.msra.mxu0 0.0
    %201 = vmatprep.subr.mxu0 0.0
    %202 = vmatpush1.msra.mxu0 0.0
    %203 = vmatprep.subr.mxu0 0.0
    %204 = vmatpush1.msra.mxu0 0.0
    %205 = vmatprep.subr.mxu0 0.0
    %206 = vmatpush1.msra.mxu0 0.0
    %207 = vmatprep.subr.mxu0 0.0
    %208 = vmatpush1.msra.mxu0 0.0
    %209 = vmatprep.subr.mxu0 0.0
    %210 = vmatpush1.msra.mxu0 0.0
    %211 = vmatprep.subr.mxu0 0.0
    %212 = vmatpush1.msra.mxu0 0.0
    %213 = vmatprep.subr.mxu0 0.0
    %214 = vmatpush1.msra.mxu0 0.0
    %215 = vmatprep.subr.mxu0 0.0
    %216 = vmatpush1.msra.mxu0 0.0
    %217 = vmatprep.subr.mxu0 0.0
    %218 = vmatpush1.msra.mxu0 0.0
    %219 = vmatprep.subr.mxu0 0.0
    %220 = vmatpush1.msra.mxu0 0.0
    %221 = vmatprep.subr.mxu0 0.0
    %222 = vmatpush1.msra.mxu0 0.0
    %223 = vmatprep.subr.mxu0 0.0
    %224 = vmatpush1.msra.mxu0 0.0
    %225 = vmatprep.subr.mxu0 0.0
    %226 = vmatpush1.msra.mxu0 0.0
    %227 = vmatprep.subr.mxu0 0.0
    %228 = vmatpush1.msra.mxu0 0.0
    %229 = vmatprep.subr.mxu0 0.0
    %230 = vmatpush1.msra.mxu0 0.0
    %231 = vmatprep.subr.mxu0 0.0
    %232 = vmatpush1.msra.mxu0 0.0
    %233 = vmatprep.subr.mxu0 0.0
    %234 = vmatpush1.msra.mxu0 0.0
    %235 = vmatprep.subr.mxu0 0.0
    %236 = vmatpush1.msra.mxu0 0.0
    %237 = vmatprep.subr.mxu0 0.0
    %238 = vmatpush1.msra.mxu0 0.0
    %239 = vmatprep.subr.mxu0 0.0
    %240 = vmatpush1.msra.mxu0 0.0
    %241 = vmatprep.subr.mxu0 0.0
    %242 = vmatpush1.msra.mxu0 0.0
    %243 = vmatprep.subr.mxu0 0.0
    %244 = vmatpush1.msra.mxu0 0.0
    %245 = vmatprep.subr.mxu0 0.0
    %246 = vmatpush1.msra.mxu0 0.0
    %247 = vmatprep.subr.mxu0 0.0
    %248 = vmatpush1.msra.mxu0 0.0
    %249 = vmatprep.mubr.f32.mxu0 0.0
    %250 = vmatmul.mubr.f32.gmra.mrb[0].mxu0 %v180
    %v251 = vpop.f32.mrb[0].mxu0
    %v252 = vadd.f32 %v177, %v251
    %v253 = vpop.f32.mrb[0].mxu0
    %254 = vmatprep.mubr.f32.mxu0 0.0
    %255 = vmatmul.mubr.f32.gmra.mrb[0].mxu0 %v183
    %v256 = vpop.f32.mrb[0].mxu0
    %v257 = vadd.f32 %v177, %v256
    %v258 = vpop.f32.mrb[0].mxu0
    %259 = vdwg.mxu0
    %261 = vrot.lane.b32.xlu0 %v151, 120
    %v262 = vpop.permute.xlu0 %261
    %264 = vrot.lane.b32.xlu0 %v156, 120
    %v265 = vpop.permute.xlu0 %264
    %266 = vrot.lane.b32.xlu0 %v151, 112
    %v267 = vpop.permute.xlu0 %266
    %268 = vrot.lane.b32.xlu0 %v156, 112
    %v269 = vpop.permute.xlu0 %268
    %270 = vrot.lane.b32.xlu0 %v151, 104
    %v271 = vpop.permute.xlu0 %270
    %272 = vrot.lane.b32.xlu0 %v156, 104
    %v273 = vpop.permute.xlu0 %272
    %275 = vrot.lane.b32.xlu0 %v252, 120
    %v276 = vpop.permute.xlu0 %275
    %279 = vrot.lane.b32.xlu0 %v257, 120
    %v280 = vpop.permute.xlu0 %279
    %282 = vrot.lane.b32.xlu0 %v252, 112
    %v283 = vpop.permute.xlu0 %282
    %285 = vrot.lane.b32.xlu0 %v257, 112
    %v286 = vpop.permute.xlu0 %285
    %288 = vrot.lane.b32.xlu0 %v252, 104
    %v289 = vpop.permute.xlu0 %288
    %291 = vrot.lane.b32.xlu0 %v257, 104
    %v292 = vpop.permute.xlu0 %291
    %294 = vrot.lane.b32.xlu0 %v151, 96
    %v295 = vpop.permute.xlu0 %294
    %vm296 = vcmask 64512
    %v297 = vsel %vm296, %v151, 0
    %v299 = vsel %vm296, %v295, 0
    %301 = vmatprep.subr.mxu0 0.0
    %302 = vmatpush1.xpose.msra.mxu0 %v299
    %303 = vmatprep.subr.mxu0 0.0
    %304 = vmatpush1.xpose.msra.mxu0 0.0
    %305 = vmatprep.subr.mxu0 0.0
    %306 = vmatpush1.xpose.msra.mxu0 0.0
    %307 = vmatprep.subr.mxu0 0.0
    %308 = vmatpush1.xpose.msra.mxu0 0.0
    %309 = vmatprep.subr.mxu0 0.0
    %310 = vmatpush1.xpose.msra.mxu0 0.0
    %311 = vmatprep.subr.mxu0 0.0
    %312 = vmatpush1.xpose.msra.mxu0 0.0
    %313 = vmatprep.subr.mxu0 0.0
    %314 = vmatpush1.xpose.msra.mxu0 0.0
    %315 = vmatprep.subr.mxu0 0.0
    %316 = vmatpush1.xpose.msra.mxu0 0.0
    %317 = vmatprep.subr.mxu0 0.0
    %318 = vmatpush1.xpose.msra.mxu0 0.0
    %319 = vmatprep.subr.mxu0 0.0
    %320 = vmatpush1.xpose.msra.mxu0 0.0
    %321 = vmatprep.subr.mxu0 0.0
    %322 = vmatpush1.xpose.msra.mxu0 0.0
    %323 = vmatprep.subr.mxu0 0.0
    %324 = vmatpush1.xpose.msra.mxu0 0.0
    %325 = vmatprep.subr.mxu0 0.0
    %326 = vmatpush1.xpose.msra.mxu0 0.0
    %327 = vmatprep.subr.mxu0 0.0
    %328 = vmatpush1.xpose.msra.mxu0 0.0
    %329 = vmatprep.subr.mxu0 0.0
    %330 = vmatpush1.xpose.msra.mxu0 0.0
    %331 = vmatprep.subr.mxu0 0.0
    %332 = vmatpush1.xpose.msra.mxu0 0.0
    %333 = vmatprep.subr.mxu0 0.0
    %334 = vmatpush1.xpose.msra.mxu0 0.0
    %335 = vmatprep.subr.mxu0 0.0
    %336 = vmatpush1.xpose.msra.mxu0 0.0
    %337 = vmatprep.subr.mxu0 0.0
    %338 = vmatpush1.xpose.msra.mxu0 0.0
    %339 = vmatprep.subr.mxu0 0.0
    %340 = vmatpush1.xpose.msra.mxu0 0.0
    %341 = vmatprep.subr.mxu0 0.0
    %342 = vmatpush1.xpose.msra.mxu0 0.0
    %343 = vmatprep.subr.mxu0 0.0
    %344 = vmatpush1.xpose.msra.mxu0 0.0
    %345 = vmatprep.subr.mxu0 0.0
    %346 = vmatpush1.xpose.msra.mxu0 0.0
    %347 = vmatprep.subr.mxu0 0.0
    %348 = vmatpush1.xpose.msra.mxu0 0.0
    %349 = vmatprep.subr.mxu0 0.0
    %350 = vmatpush1.xpose.msra.mxu0 0.0
    %351 = vmatprep.subr.mxu0 0.0
    %352 = vmatpush1.xpose.msra.mxu0 0.0
    %353 = vmatprep.subr.mxu0 0.0
    %354 = vmatpush1.xpose.msra.mxu0 0.0
    %355 = vmatprep.subr.mxu0 0.0
    %356 = vmatpush1.xpose.msra.mxu0 0.0
    %357 = vmatprep.subr.mxu0 0.0
    %358 = vmatpush1.xpose.msra.mxu0 0.0
    %359 = vmatprep.subr.mxu0 0.0
    %360 = vmatpush1.xpose.msra.mxu0 0.0
    %361 = vmatprep.subr.mxu0 0.0
    %362 = vmatpush1.xpose.msra.mxu0 0.0
    %363 = vmatprep.subr.mxu0 0.0
    %364 = vmatpush1.xpose.msra.mxu0 0.0
    %365 = vmatprep.mubr.f32.mxu0 0.0
    %366 = vmatmul.mubr.f32.gmra.mrb[0].mxu0 %v297
    %v367 = vpop.f32.mrb[0].mxu0
    %v368 = vadd.f32 0.0, %v367
    %v369 = vpop.f32.mrb[0].mxu0
    %370 = vdwg.mxu0
    %371 = vrot.lane.b32.xlu0 %v156, 96
    %v372 = vpop.permute.xlu0 %371
    %v373 = vsel %vm296, %v156, 0
    %v375 = vsel %vm296, %v372, 0
    %377 = vmatprep.subr.mxu0 0.0
    %378 = vmatpush1.xpose.msra.mxu0 %v375
    %379 = vmatprep.subr.mxu0 0.0
    %380 = vmatpush1.xpose.msra.mxu0 0.0
    %381 = vmatprep.subr.mxu0 0.0
    %382 = vmatpush1.xpose.msra.mxu0 0.0
    %383 = vmatprep.subr.mxu0 0.0
    %384 = vmatpush1.xpose.msra.mxu0 0.0
    %385 = vmatprep.subr.mxu0 0.0
    %386 = vmatpush1.xpose.msra.mxu0 0.0
    %387 = vmatprep.subr.mxu0 0.0
    %388 = vmatpush1.xpose.msra.mxu0 0.0
    %389 = vmatprep.subr.mxu0 0.0
    %390 = vmatpush1.xpose.msra.mxu0 0.0
    %391 = vmatprep.subr.mxu0 0.0
    %392 = vmatpush1.xpose.msra.mxu0 0.0
    %393 = vmatprep.subr.mxu0 0.0
    %394 = vmatpush1.xpose.msra.mxu0 0.0
    %395 = vmatprep.subr.mxu0 0.0
    %396 = vmatpush1.xpose.msra.mxu0 0.0
    %397 = vmatprep.subr.mxu0 0.0
    %398 = vmatpush1.xpose.msra.mxu0 0.0
    %399 = vmatprep.subr.mxu0 0.0
    %400 = vmatpush1.xpose.msra.mxu0 0.0
    %401 = vmatprep.subr.mxu0 0.0
    %402 = vmatpush1.xpose.msra.mxu0 0.0
    %403 = vmatprep.subr.mxu0 0.0
    %404 = vmatpush1.xpose.msra.mxu0 0.0
    %405 = vmatprep.subr.mxu0 0.0
    %406 = vmatpush1.xpose.msra.mxu0 0.0
    %407 = vmatprep.subr.mxu0 0.0
    %408 = vmatpush1.xpose.msra.mxu0 0.0
    %409 = vmatprep.subr.mxu0 0.0
    %410 = vmatpush1.xpose.msra.mxu0 0.0
    %411 = vmatprep.subr.mxu0 0.0
    %412 = vmatpush1.xpose.msra.mxu0 0.0
    %413 = vmatprep.subr.mxu0 0.0
    %414 = vmatpush1.xpose.msra.mxu0 0.0
    %415 = vmatprep.subr.mxu0 0.0
    %416 = vmatpush1.xpose.msra.mxu0 0.0
    %417 = vmatprep.subr.mxu0 0.0
    %418 = vmatpush1.xpose.msra.mxu0 0.0
    %419 = vmatprep.subr.mxu0 0.0
    %420 = vmatpush1.xpose.msra.mxu0 0.0
    %421 = vmatprep.subr.mxu0 0.0
    %422 = vmatpush1.xpose.msra.mxu0 0.0
    %423 = vmatprep.subr.mxu0 0.0
    %424 = vmatpush1.xpose.msra.mxu0 0.0
    %425 = vmatprep.subr.mxu0 0.0
    %426 = vmatpush1.xpose.msra.mxu0 0.0
    %427 = vmatprep.subr.mxu0 0.0
    %428 = vmatpush1.xpose.msra.mxu0 0.0
    %429 = vmatprep.subr.mxu0 0.0
    %430 = vmatpush1.xpose.msra.mxu0 0.0
    %431 = vmatprep.subr.mxu0 0.0
    %432 = vmatpush1.xpose.msra.mxu0 0.0
    %433 = vmatprep.subr.mxu0 0.0
    %434 = vmatpush1.xpose.msra.mxu0 0.0
    %435 = vmatprep.subr.mxu0 0.0
    %436 = vmatpush1.xpose.msra.mxu0 0.0
    %437 = vmatprep.subr.mxu0 0.0
    %438 = vmatpush1.xpose.msra.mxu0 0.0
    %439 = vmatprep.subr.mxu0 0.0
    %440 = vmatpush1.xpose.msra.mxu0 0.0
    %441 = vmatprep.mubr.f32.mxu0 0.0
    %442 = vmatmul.mubr.f32.gmra.mrb[0].mxu0 %v373
    %v443 = vpop.f32.mrb[0].mxu0
    %v444 = vadd.f32 0.0, %v443
    %v445 = vpop.f32.mrb[0].mxu0
    %446 = vdwg.mxu0
    %447 = vrot.lane.b32.xlu0 %v262, 96
    %v448 = vpop.permute.xlu0 %447
    %v449 = vsel %vm296, %v262, 0
    %v451 = vsel %vm296, %v448, 0
    %453 = vmatprep.subr.mxu0 0.0
    %454 = vmatpush1.xpose.msra.mxu0 %v451
    %455 = vmatprep.subr.mxu0 0.0
    %456 = vmatpush1.xpose.msra.mxu0 0.0
    %457 = vmatprep.subr.mxu0 0.0
    %458 = vmatpush1.xpose.msra.mxu0 0.0
    %459 = vmatprep.subr.mxu0 0.0
    %460 = vmatpush1.xpose.msra.mxu0 0.0
    %461 = vmatprep.subr.mxu0 0.0
    %462 = vmatpush1.xpose.msra.mxu0 0.0
    %463 = vmatprep.subr.mxu0 0.0
    %464 = vmatpush1.xpose.msra.mxu0 0.0
    %465 = vmatprep.subr.mxu0 0.0
    %466 = vmatpush1.xpose.msra.mxu0 0.0
    %467 = vmatprep.subr.mxu0 0.0
    %468 = vmatpush1.xpose.msra.mxu0 0.0
    %469 = vmatprep.subr.mxu0 0.0
    %470 = vmatpush1.xpose.msra.mxu0 0.0
    %471 = vmatprep.subr.mxu0 0.0
    %472 = vmatpush1.xpose.msra.mxu0 0.0
    %473 = vmatprep.subr.mxu0 0.0
    %474 = vmatpush1.xpose.msra.mxu0 0.0
    %475 = vmatprep.subr.mxu0 0.0
    %476 = vmatpush1.xpose.msra.mxu0 0.0
    %477 = vmatprep.subr.mxu0 0.0
    %478 = vmatpush1.xpose.msra.mxu0 0.0
    %479 = vmatprep.subr.mxu0 0.0
    %480 = vmatpush1.xpose.msra.mxu0 0.0
    %481 = vmatprep.subr.mxu0 0.0
    %482 = vmatpush1.xpose.msra.mxu0 0.0
    %483 = vmatprep.subr.mxu0 0.0
    %484 = vmatpush1.xpose.msra.mxu0 0.0
    %485 = vmatprep.subr.mxu0 0.0
    %486 = vmatpush1.xpose.msra.mxu0 0.0
    %487 = vmatprep.subr.mxu0 0.0
    %488 = vmatpush1.xpose.msra.mxu0 0.0
    %489 = vmatprep.subr.mxu0 0.0
    %490 = vmatpush1.xpose.msra.mxu0 0.0
    %491 = vmatprep.subr.mxu0 0.0
    %492 = vmatpush1.xpose.msra.mxu0 0.0
    %493 = vmatprep.subr.mxu0 0.0
    %494 = vmatpush1.xpose.msra.mxu0 0.0
    %495 = vmatprep.subr.mxu0 0.0
    %496 = vmatpush1.xpose.msra.mxu0 0.0
    %497 = vmatprep.subr.mxu0 0.0
    %498 = vmatpush1.xpose.msra.mxu0 0.0
    %499 = vmatprep.subr.mxu0 0.0
    %500 = vmatpush1.xpose.msra.mxu0 0.0
    %501 = vmatprep.subr.mxu0 0.0
    %502 = vmatpush1.xpose.msra.mxu0 0.0
    %503 = vmatprep.subr.mxu0 0.0
    %504 = vmatpush1.xpose.msra.mxu0 0.0
    %505 = vmatprep.subr.mxu0 0.0
    %506 = vmatpush1.xpose.msra.mxu0 0.0
    %507 = vmatprep.subr.mxu0 0.0
    %508 = vmatpush1.xpose.msra.mxu0 0.0
    %509 = vmatprep.subr.mxu0 0.0
    %510 = vmatpush1.xpose.msra.mxu0 0.0
    %511 = vmatprep.subr.mxu0 0.0
    %512 = vmatpush1.xpose.msra.mxu0 0.0
    %513 = vmatprep.subr.mxu0 0.0
    %514 = vmatpush1.xpose.msra.mxu0 0.0
    %515 = vmatprep.subr.mxu0 0.0
    %516 = vmatpush1.xpose.msra.mxu0 0.0
    %517 = vmatprep.mubr.f32.mxu0 0.0
    %518 = vmatmul.mubr.f32.gmra.mrb[0].mxu0 %v449
    %v519 = vpop.f32.mrb[0].mxu0
    %v520 = vadd.f32 0.0, %v519
    %v521 = vpop.f32.mrb[0].mxu0
    %522 = vdwg.mxu0
    %523 = vrot.lane.b32.xlu0 %v265, 96
    %v524 = vpop.permute.xlu0 %523
    %v525 = vsel %vm296, %v265, 0
    %v527 = vsel %vm296, %v524, 0
    %529 = vmatprep.subr.mxu0 0.0
    %530 = vmatpush1.xpose.msra.mxu0 %v527
    %531 = vmatprep.subr.mxu0 0.0
    %532 = vmatpush1.xpose.msra.mxu0 0.0
    %533 = vmatprep.subr.mxu0 0.0
    %534 = vmatpush1.xpose.msra.mxu0 0.0
    %535 = vmatprep.subr.mxu0 0.0
    %536 = vmatpush1.xpose.msra.mxu0 0.0
    %537 = vmatprep.subr.mxu0 0.0
    %538 = vmatpush1.xpose.msra.mxu0 0.0
    %539 = vmatprep.subr.mxu0 0.0
    %540 = vmatpush1.xpose.msra.mxu0 0.0
    %541 = vmatprep.subr.mxu0 0.0
    %542 = vmatpush1.xpose.msra.mxu0 0.0
    %543 = vmatprep.subr.mxu0 0.0
    %544 = vmatpush1.xpose.msra.mxu0 0.0
    %545 = vmatprep.subr.mxu0 0.0
    %546 = vmatpush1.xpose.msra.mxu0 0.0
    %547 = vmatprep.subr.mxu0 0.0
    %548 = vmatpush1.xpose.msra.mxu0 0.0
    %549 = vmatprep.subr.mxu0 0.0
    %550 = vmatpush1.xpose.msra.mxu0 0.0
    %551 = vmatprep.subr.mxu0 0.0
    %552 = vmatpush1.xpose.msra.mxu0 0.0
    %553 = vmatprep.subr.mxu0 0.0
    %554 = vmatpush1.xpose.msra.mxu0 0.0
    %555 = vmatprep.subr.mxu0 0.0
    %556 = vmatpush1.xpose.msra.mxu0 0.0
    %557 = vmatprep.subr.mxu0 0.0
    %558 = vmatpush1.xpose.msra.mxu0 0.0
    %559 = vmatprep.subr.mxu0 0.0
    %560 = vmatpush1.xpose.msra.mxu0 0.0
    %561 = vmatprep.subr.mxu0 0.0
    %562 = vmatpush1.xpose.msra.mxu0 0.0
    %563 = vmatprep.subr.mxu0 0.0
    %564 = vmatpush1.xpose.msra.mxu0 0.0
    %565 = vmatprep.subr.mxu0 0.0
    %566 = vmatpush1.xpose.msra.mxu0 0.0
    %567 = vmatprep.subr.mxu0 0.0
    %568 = vmatpush1.xpose.msra.mxu0 0.0
    %569 = vmatprep.subr.mxu0 0.0
    %570 = vmatpush1.xpose.msra.mxu0 0.0
    %571 = vmatprep.subr.mxu0 0.0
    %572 = vmatpush1.xpose.msra.mxu0 0.0
    %573 = vmatprep.subr.mxu0 0.0
    %574 = vmatpush1.xpose.msra.mxu0 0.0
    %575 = vmatprep.subr.mxu0 0.0
    %576 = vmatpush1.xpose.msra.mxu0 0.0
    %577 = vmatprep.subr.mxu0 0.0
    %578 = vmatpush1.xpose.msra.mxu0 0.0
    %579 = vmatprep.subr.mxu0 0.0
    %580 = vmatpush1.xpose.msra.mxu0 0.0
    %581 = vmatprep.subr.mxu0 0.0
    %582 = vmatpush1.xpose.msra.mxu0 0.0
    %583 = vmatprep.subr.mxu0 0.0
    %584 = vmatpush1.xpose.msra.mxu0 0.0
    %585 = vmatprep.subr.mxu0 0.0
    %586 = vmatpush1.xpose.msra.mxu0 0.0
    %587 = vmatprep.subr.mxu0 0.0
    %588 = vmatpush1.xpose.msra.mxu0 0.0
    %589 = vmatprep.subr.mxu0 0.0
    %590 = vmatpush1.xpose.msra.mxu0 0.0
    %591 = vmatprep.subr.mxu0 0.0
    %592 = vmatpush1.xpose.msra.mxu0 0.0
    %593 = vmatprep.mubr.f32.mxu0 0.0
    %594 = vmatmul.mubr.f32.gmra.mrb[0].mxu0 %v525
    %v595 = vpop.f32.mrb[0].mxu0
    %v596 = vadd.f32 0.0, %v595
    %v597 = vpop.f32.mrb[0].mxu0
    %598 = vdwg.mxu0
    %599 = vrot.lane.b32.xlu0 %v267, 96
    %v600 = vpop.permute.xlu0 %599
    %v601 = vsel %vm296, %v267, 0
    %v603 = vsel %vm296, %v600, 0
    %605 = vmatprep.subr.mxu0 0.0
    %606 = vmatpush1.xpose.msra.mxu0 %v603
    %607 = vmatprep.subr.mxu0 0.0
    %608 = vmatpush1.xpose.msra.mxu0 0.0
    %609 = vmatprep.subr.mxu0 0.0
    %610 = vmatpush1.xpose.msra.mxu0 0.0
    %611 = vmatprep.subr.mxu0 0.0
    %612 = vmatpush1.xpose.msra.mxu0 0.0
    %613 = vmatprep.subr.mxu0 0.0
    %614 = vmatpush1.xpose.msra.mxu0 0.0
    %615 = vmatprep.subr.mxu0 0.0
    %616 = vmatpush1.xpose.msra.mxu0 0.0
    %617 = vmatprep.subr.mxu0 0.0
    %618 = vmatpush1.xpose.msra.mxu0 0.0
    %619 = vmatprep.subr.mxu0 0.0
    %620 = vmatpush1.xpose.msra.mxu0 0.0
    %621 = vmatprep.subr.mxu0 0.0
    %622 = vmatpush1.xpose.msra.mxu0 0.0
    %623 = vmatprep.subr.mxu0 0.0
    %624 = vmatpush1.xpose.msra.mxu0 0.0
    %625 = vmatprep.subr.mxu0 0.0
    %626 = vmatpush1.xpose.msra.mxu0 0.0
    %627 = vmatprep.subr.mxu0 0.0
    %628 = vmatpush1.xpose.msra.mxu0 0.0
    %629 = vmatprep.subr.mxu0 0.0
    %630 = vmatpush1.xpose.msra.mxu0 0.0
    %631 = vmatprep.subr.mxu0 0.0
    %632 = vmatpush1.xpose.msra.mxu0 0.0
    %633 = vmatprep.subr.mxu0 0.0
    %634 = vmatpush1.xpose.msra.mxu0 0.0
    %635 = vmatprep.subr.mxu0 0.0
    %636 = vmatpush1.xpose.msra.mxu0 0.0
    %637 = vmatprep.subr.mxu0 0.0
    %638 = vmatpush1.xpose.msra.mxu0 0.0
    %639 = vmatprep.subr.mxu0 0.0
    %640 = vmatpush1.xpose.msra.mxu0 0.0
    %641 = vmatprep.subr.mxu0 0.0
    %642 = vmatpush1.xpose.msra.mxu0 0.0
    %643 = vmatprep.subr.mxu0 0.0
    %644 = vmatpush1.xpose.msra.mxu0 0.0
    %645 = vmatprep.subr.mxu0 0.0
    %646 = vmatpush1.xpose.msra.mxu0 0.0
    %647 = vmatprep.subr.mxu0 0.0
    %648 = vmatpush1.xpose.msra.mxu0 0.0
    %649 = vmatprep.subr.mxu0 0.0
    %650 = vmatpush1.xpose.msra.mxu0 0.0
    %651 = vmatprep.subr.mxu0 0.0
    %652 = vmatpush1.xpose.msra.mxu0 0.0
    %653 = vmatprep.subr.mxu0 0.0
    %654 = vmatpush1.xpose.msra.mxu0 0.0
    %655 = vmatprep.subr.mxu0 0.0
    %656 = vmatpush1.xpose.msra.mxu0 0.0
    %657 = vmatprep.subr.mxu0 0.0
    %658 = vmatpush1.xpose.msra.mxu0 0.0
    %659 = vmatprep.subr.mxu0 0.0
    %660 = vmatpush1.xpose.msra.mxu0 0.0
    %661 = vmatprep.subr.mxu0 0.0
    %662 = vmatpush1.xpose.msra.mxu0 0.0
    %663 = vmatprep.subr.mxu0 0.0
    %664 = vmatpush1.xpose.msra.mxu0 0.0
    %665 = vmatprep.subr.mxu0 0.0
    %666 = vmatpush1.xpose.msra.mxu0 0.0
    %667 = vmatprep.subr.mxu0 0.0
    %668 = vmatpush1.xpose.msra.mxu0 0.0
    %669 = vmatprep.mubr.f32.mxu0 0.0
    %670 = vmatmul.mubr.f32.gmra.mrb[0].mxu0 %v601
    %v671 = vpop.f32.mrb[0].mxu0
    %v672 = vadd.f32 0.0, %v671
    %v673 = vpop.f32.mrb[0].mxu0
    %674 = vdwg.mxu0
    %675 = vrot.lane.b32.xlu0 %v269, 96
    %v676 = vpop.permute.xlu0 %675
    %v677 = vsel %vm296, %v269, 0
    %v679 = vsel %vm296, %v676, 0
    %681 = vmatprep.subr.mxu0 0.0
    %682 = vmatpush1.xpose.msra.mxu0 %v679
    %683 = vmatprep.subr.mxu0 0.0
    %684 = vmatpush1.xpose.msra.mxu0 0.0
    %685 = vmatprep.subr.mxu0 0.0
    %686 = vmatpush1.xpose.msra.mxu0 0.0
    %687 = vmatprep.subr.mxu0 0.0
    %688 = vmatpush1.xpose.msra.mxu0 0.0
    %689 = vmatprep.subr.mxu0 0.0
    %690 = vmatpush1.xpose.msra.mxu0 0.0
    %691 = vmatprep.subr.mxu0 0.0
    %692 = vmatpush1.xpose.msra.mxu0 0.0
    %693 = vmatprep.subr.mxu0 0.0
    %694 = vmatpush1.xpose.msra.mxu0 0.0
    %695 = vmatprep.subr.mxu0 0.0
    %696 = vmatpush1.xpose.msra.mxu0 0.0
    %697 = vmatprep.subr.mxu0 0.0
    %698 = vmatpush1.xpose.msra.mxu0 0.0
    %699 = vmatprep.subr.mxu0 0.0
    %700 = vmatpush1.xpose.msra.mxu0 0.0
    %701 = vmatprep.subr.mxu0 0.0
    %702 = vmatpush1.xpose.msra.mxu0 0.0
    %703 = vmatprep.subr.mxu0 0.0
    %704 = vmatpush1.xpose.msra.mxu0 0.0
    %705 = vmatprep.subr.mxu0 0.0
    %706 = vmatpush1.xpose.msra.mxu0 0.0
    %707 = vmatprep.subr.mxu0 0.0
    %708 = vmatpush1.xpose.msra.mxu0 0.0
    %709 = vmatprep.subr.mxu0 0.0
    %710 = vmatpush1.xpose.msra.mxu0 0.0
    %711 = vmatprep.subr.mxu0 0.0
    %712 = vmatpush1.xpose.msra.mxu0 0.0
    %713 = vmatprep.subr.mxu0 0.0
    %714 = vmatpush1.xpose.msra.mxu0 0.0
    %715 = vmatprep.subr.mxu0 0.0
    %716 = vmatpush1.xpose.msra.mxu0 0.0
    %717 = vmatprep.subr.mxu0 0.0
    %718 = vmatpush1.xpose.msra.mxu0 0.0
    %719 = vmatprep.subr.mxu0 0.0
    %720 = vmatpush1.xpose.msra.mxu0 0.0
    %721 = vmatprep.subr.mxu0 0.0
    %722 = vmatpush1.xpose.msra.mxu0 0.0
    %723 = vmatprep.subr.mxu0 0.0
    %724 = vmatpush1.xpose.msra.mxu0 0.0
    %725 = vmatprep.subr.mxu0 0.0
    %726 = vmatpush1.xpose.msra.mxu0 0.0
    %727 = vmatprep.subr.mxu0 0.0
    %728 = vmatpush1.xpose.msra.mxu0 0.0
    %729 = vmatprep.subr.mxu0 0.0
    %730 = vmatpush1.xpose.msra.mxu0 0.0
    %731 = vmatprep.subr.mxu0 0.0
    %732 = vmatpush1.xpose.msra.mxu0 0.0
    %733 = vmatprep.subr.mxu0 0.0
    %734 = vmatpush1.xpose.msra.mxu0 0.0
    %735 = vmatprep.subr.mxu0 0.0
    %736 = vmatpush1.xpose.msra.mxu0 0.0
    %737 = vmatprep.subr.mxu0 0.0
    %738 = vmatpush1.xpose.msra.mxu0 0.0
    %739 = vmatprep.subr.mxu0 0.0
    %740 = vmatpush1.xpose.msra.mxu0 0.0
    %741 = vmatprep.subr.mxu0 0.0
    %742 = vmatpush1.xpose.msra.mxu0 0.0
    %743 = vmatprep.subr.mxu0 0.0
    %744 = vmatpush1.xpose.msra.mxu0 0.0
    %745 = vmatprep.mubr.f32.mxu0 0.0
    %746 = vmatmul.mubr.f32.gmra.mrb[0].mxu0 %v677
    %v747 = vpop.f32.mrb[0].mxu0
    %v748 = vadd.f32 0.0, %v747
    %v749 = vpop.f32.mrb[0].mxu0
    %750 = vdwg.mxu0
    %751 = vrot.lane.b32.xlu0 %v271, 96
    %v752 = vpop.permute.xlu0 %751
    %v753 = vsel %vm296, %v271, 0
    %v755 = vsel %vm296, %v752, 0
    %757 = vmatprep.subr.mxu0 0.0
    %758 = vmatpush1.xpose.msra.mxu0 %v755
    %759 = vmatprep.subr.mxu0 0.0
    %760 = vmatpush1.xpose.msra.mxu0 0.0
    %761 = vmatprep.subr.mxu0 0.0
    %762 = vmatpush1.xpose.msra.mxu0 0.0
    %763 = vmatprep.subr.mxu0 0.0
    %764 = vmatpush1.xpose.msra.mxu0 0.0
    %765 = vmatprep.subr.mxu0 0.0
    %766 = vmatpush1.xpose.msra.mxu0 0.0
    %767 = vmatprep.subr.mxu0 0.0
    %768 = vmatpush1.xpose.msra.mxu0 0.0
    %769 = vmatprep.subr.mxu0 0.0
    %770 = vmatpush1.xpose.msra.mxu0 0.0
    %771 = vmatprep.subr.mxu0 0.0
    %772 = vmatpush1.xpose.msra.mxu0 0.0
    %773 = vmatprep.subr.mxu0 0.0
    %774 = vmatpush1.xpose.msra.mxu0 0.0
    %775 = vmatprep.subr.mxu0 0.0
    %776 = vmatpush1.xpose.msra.mxu0 0.0
    %777 = vmatprep.subr.mxu0 0.0
    %778 = vmatpush1.xpose.msra.mxu0 0.0
    %779 = vmatprep.subr.mxu0 0.0
    %780 = vmatpush1.xpose.msra.mxu0 0.0
    %781 = vmatprep.subr.mxu0 0.0
    %782 = vmatpush1.xpose.msra.mxu0 0.0
    %783 = vmatprep.subr.mxu0 0.0
    %784 = vmatpush1.xpose.msra.mxu0 0.0
    %785 = vmatprep.subr.mxu0 0.0
    %786 = vmatpush1.xpose.msra.mxu0 0.0
    %787 = vmatprep.subr.mxu0 0.0
    %788 = vmatpush1.xpose.msra.mxu0 0.0
    %789 = vmatprep.subr.mxu0 0.0
    %790 = vmatpush1.xpose.msra.mxu0 0.0
    %791 = vmatprep.subr.mxu0 0.0
    %792 = vmatpush1.xpose.msra.mxu0 0.0
    %793 = vmatprep.subr.mxu0 0.0
    %794 = vmatpush1.xpose.msra.mxu0 0.0
    %795 = vmatprep.subr.mxu0 0.0
    %796 = vmatpush1.xpose.msra.mxu0 0.0
    %797 = vmatprep.subr.mxu0 0.0
    %798 = vmatpush1.xpose.msra.mxu0 0.0
    %799 = vmatprep.subr.mxu0 0.0
    %800 = vmatpush1.xpose.msra.mxu0 0.0
    %801 = vmatprep.subr.mxu0 0.0
    %802 = vmatpush1.xpose.msra.mxu0 0.0
    %803 = vmatprep.subr.mxu0 0.0
    %804 = vmatpush1.xpose.msra.mxu0 0.0
    %805 = vmatprep.subr.mxu0 0.0
    %806 = vmatpush1.xpose.msra.mxu0 0.0
    %807 = vmatprep.subr.mxu0 0.0
    %808 = vmatpush1.xpose.msra.mxu0 0.0
    %809 = vmatprep.subr.mxu0 0.0
    %810 = vmatpush1.xpose.msra.mxu0 0.0
    %811 = vmatprep.subr.mxu0 0.0
    %812 = vmatpush1.xpose.msra.mxu0 0.0
    %813 = vmatprep.subr.mxu0 0.0
    %814 = vmatpush1.xpose.msra.mxu0 0.0
    %815 = vmatprep.subr.mxu0 0.0
    %816 = vmatpush1.xpose.msra.mxu0 0.0
    %817 = vmatprep.subr.mxu0 0.0
    %818 = vmatpush1.xpose.msra.mxu0 0.0
    %819 = vmatprep.subr.mxu0 0.0
    %820 = vmatpush1.xpose.msra.mxu0 0.0
    %821 = vmatprep.mubr.f32.mxu0 0.0
    %822 = vmatmul.mubr.f32.gmra.mrb[0].mxu0 %v753
    %v823 = vpop.f32.mrb[0].mxu0
    %v824 = vadd.f32 0.0, %v823
    %v825 = vpop.f32.mrb[0].mxu0
    %826 = vdwg.mxu0
    %827 = vrot.lane.b32.xlu0 %v273, 96
    %v828 = vpop.permute.xlu0 %827
    %v829 = vsel %vm296, %v273, 0
    %v831 = vsel %vm296, %v828, 0
    %833 = vmatprep.subr.mxu0 0.0
    %834 = vmatpush1.xpose.msra.mxu0 %v831
    %835 = vmatprep.subr.mxu0 0.0
    %836 = vmatpush1.xpose.msra.mxu0 0.0
    %837 = vmatprep.subr.mxu0 0.0
    %838 = vmatpush1.xpose.msra.mxu0 0.0
    %839 = vmatprep.subr.mxu0 0.0
    %840 = vmatpush1.xpose.msra.mxu0 0.0
    %841 = vmatprep.subr.mxu0 0.0
    %842 = vmatpush1.xpose.msra.mxu0 0.0
    %843 = vmatprep.subr.mxu0 0.0
    %844 = vmatpush1.xpose.msra.mxu0 0.0
    %845 = vmatprep.subr.mxu0 0.0
    %846 = vmatpush1.xpose.msra.mxu0 0.0
    %847 = vmatprep.subr.mxu0 0.0
    %848 = vmatpush1.xpose.msra.mxu0 0.0
    %849 = vmatprep.subr.mxu0 0.0
    %850 = vmatpush1.xpose.msra.mxu0 0.0
    %851 = vmatprep.subr.mxu0 0.0
    %852 = vmatpush1.xpose.msra.mxu0 0.0
    %853 = vmatprep.subr.mxu0 0.0
    %854 = vmatpush1.xpose.msra.mxu0 0.0
    %855 = vmatprep.subr.mxu0 0.0
    %856 = vmatpush1.xpose.msra.mxu0 0.0
    %857 = vmatprep.subr.mxu0 0.0
    %858 = vmatpush1.xpose.msra.mxu0 0.0
    %859 = vmatprep.subr.mxu0 0.0
    %860 = vmatpush1.xpose.msra.mxu0 0.0
    %861 = vmatprep.subr.mxu0 0.0
    %862 = vmatpush1.xpose.msra.mxu0 0.0
    %863 = vmatprep.subr.mxu0 0.0
    %864 = vmatpush1.xpose.msra.mxu0 0.0
    %865 = vmatprep.subr.mxu0 0.0
    %866 = vmatpush1.xpose.msra.mxu0 0.0
    %867 = vmatprep.subr.mxu0 0.0
    %868 = vmatpush1.xpose.msra.mxu0 0.0
    %869 = vmatprep.subr.mxu0 0.0
    %870 = vmatpush1.xpose.msra.mxu0 0.0
    %871 = vmatprep.subr.mxu0 0.0
    %872 = vmatpush1.xpose.msra.mxu0 0.0
    %873 = vmatprep.subr.mxu0 0.0
    %874 = vmatpush1.xpose.msra.mxu0 0.0
    %875 = vmatprep.subr.mxu0 0.0
    %876 = vmatpush1.xpose.msra.mxu0 0.0
    %877 = vmatprep.subr.mxu0 0.0
    %878 = vmatpush1.xpose.msra.mxu0 0.0
    %879 = vmatprep.subr.mxu0 0.0
    %880 = vmatpush1.xpose.msra.mxu0 0.0
    %881 = vmatprep.subr.mxu0 0.0
    %882 = vmatpush1.xpose.msra.mxu0 0.0
    %883 = vmatprep.subr.mxu0 0.0
    %884 = vmatpush1.xpose.msra.mxu0 0.0
    %885 = vmatprep.subr.mxu0 0.0
    %886 = vmatpush1.xpose.msra.mxu0 0.0
    %887 = vmatprep.subr.mxu0 0.0
    %888 = vmatpush1.xpose.msra.mxu0 0.0
    %889 = vmatprep.subr.mxu0 0.0
    %890 = vmatpush1.xpose.msra.mxu0 0.0
    %891 = vmatprep.subr.mxu0 0.0
    %892 = vmatpush1.xpose.msra.mxu0 0.0
    %893 = vmatprep.subr.mxu0 0.0
    %894 = vmatpush1.xpose.msra.mxu0 0.0
    %895 = vmatprep.subr.mxu0 0.0
    %896 = vmatpush1.xpose.msra.mxu0 0.0
    %897 = vmatprep.mubr.f32.mxu0 0.0
    %898 = vmatmul.mubr.f32.gmra.mrb[0].mxu0 %v829
    %v899 = vpop.f32.mrb[0].mxu0
    %v900 = vadd.f32 0.0, %v899
    %v901 = vpop.f32.mrb[0].mxu0
    %902 = vdwg.mxu0
    %v903 = vsel %vm296, %v368, -inf
    %904 = vmax.xlane.f32.xlu0 %v903
    %v905 = vpop.xlane.xlu0 %904
    %v906 = vsel %vm296, %v444, -inf
    %907 = vmax.xlane.f32.xlu0 %v906
    %v908 = vpop.xlane.xlu0 %907
    %v909 = vsel %vm296, %v520, -inf
    %910 = vmax.xlane.f32.xlu0 %v909
    %v911 = vpop.xlane.xlu0 %910
    %v912 = vsel %vm296, %v596, -inf
    %913 = vmax.xlane.f32.xlu0 %v912
    %v914 = vpop.xlane.xlu0 %913
    %v915 = vsel %vm296, %v672, -inf
    %916 = vmax.xlane.f32.xlu0 %v915
    %v917 = vpop.xlane.xlu0 %916
    %v918 = vsel %vm296, %v748, -inf
    %919 = vmax.xlane.f32.xlu0 %v918
    %v920 = vpop.xlane.xlu0 %919
    %v921 = vsel %vm296, %v824, -inf
    %922 = vmax.xlane.f32.xlu0 %v921
    %v923 = vpop.xlane.xlu0 %922
    %v924 = vsel %vm296, %v900, -inf
    %925 = vmax.xlane.f32.xlu0 %v924
    %v926 = vpop.xlane.xlu0 %925
    %v927 = vsub.f32 %v368, %v905
    %v928 = vsub.f32 %v444, %v908
    %v929 = vsub.f32 %v520, %v911
    %v930 = vsub.f32 %v596, %v914
    %v931 = vsub.f32 %v672, %v917
    %v932 = vsub.f32 %v748, %v920
    %v933 = vsub.f32 %v824, %v923
    %v934 = vsub.f32 %v900, %v926
    %v935 = vmul.f32 %v927, 1.442695
    %v936 = vpow.pop %v935
    %v937 = vmul.f32 %v928, 1.442695
    %v938 = vpow.pop %v937
    %v939 = vmul.f32 %v929, 1.442695
    %v940 = vpow.pop %v939
    %v941 = vmul.f32 %v930, 1.442695
    %v942 = vpow.pop %v941
    %v943 = vmul.f32 %v931, 1.442695
    %v944 = vpow.pop %v943
    %v945 = vmul.f32 %v932, 1.442695
    %v946 = vpow.pop %v945
    %v947 = vmul.f32 %v933, 1.442695
    %v948 = vpow.pop %v947
    %v949 = vmul.f32 %v934, 1.442695
    %v950 = vpow.pop %v949
    %v951 = vsel %vm296, %v936, 0.0
    %952 = vadd.xlane.f32.xlu0 %v951
    %v953 = vpop.xlane.xlu0 %952
    %v954 = vsel %vm296, %v938, 0.0
    %955 = vadd.xlane.f32.xlu0 %v954
    %v956 = vpop.xlane.xlu0 %955
    %v957 = vsel %vm296, %v940, 0.0
    %958 = vadd.xlane.f32.xlu0 %v957
    %v959 = vpop.xlane.xlu0 %958
    %v960 = vsel %vm296, %v942, 0.0
    %961 = vadd.xlane.f32.xlu0 %v960
    %v962 = vpop.xlane.xlu0 %961
    %v963 = vsel %vm296, %v944, 0.0
    %964 = vadd.xlane.f32.xlu0 %v963
    %v965 = vpop.xlane.xlu0 %964
    %v966 = vsel %vm296, %v946, 0.0
    %967 = vadd.xlane.f32.xlu0 %v966
    %v968 = vpop.xlane.xlu0 %967
    %v969 = vsel %vm296, %v948, 0.0
    %970 = vadd.xlane.f32.xlu0 %v969
    %v971 = vpop.xlane.xlu0 %970
    %v972 = vsel %vm296, %v950, 0.0
    %973 = vadd.xlane.f32.xlu0 %v972
    %v974 = vpop.xlane.xlu0 %973
    %v975 = vrcp.pop %v953
    %v976 = vrcp.pop %v956
    %v977 = vrcp.pop %v959
    %v978 = vrcp.pop %v962
    %v979 = vrcp.pop %v965
    %v980 = vrcp.pop %v968
    %v981 = vrcp.pop %v971
    %v982 = vrcp.pop %v974
    %v983 = vmul.f32 %v936, %v975
    %v984 = vmul.f32 %v938, %v976
    %v985 = vmul.f32 %v940, %v977
    %v986 = vmul.f32 %v942, %v978
    %v987 = vmul.f32 %v944, %v979
    %v988 = vmul.f32 %v946, %v980
    %v989 = vmul.f32 %v948, %v981
    %v990 = vmul.f32 %v950, %v982
    %v992 = vsel %vm296, %v983, 0
    %994 = vmatprep.subr.mxu0 0.0
    %995 = vmatpush1.msra.mxu0 %v252
    %996 = vmatprep.subr.mxu0 0.0
    %997 = vmatpush1.msra.mxu0 0.0
    %998 = vmatprep.subr.mxu0 0.0
    %999 = vmatpush1.msra.mxu0 0.0
    %1000 = vmatprep.subr.mxu0 0.0
    %1001 = vmatpush1.msra.mxu0 0.0
    %1002 = vmatprep.subr.mxu0 0.0
    %1003 = vmatpush1.msra.mxu0 0.0
    %1004 = vmatprep.subr.mxu0 0.0
    %1005 = vmatpush1.msra.mxu0 0.0
    %1006 = vmatprep.subr.mxu0 0.0
    %1007 = vmatpush1.msra.mxu0 0.0
    %1008 = vmatprep.subr.mxu0 0.0
    %1009 = vmatpush1.msra.mxu0 0.0
    %1010 = vmatprep.subr.mxu0 0.0
    %1011 = vmatpush1.msra.mxu0 0.0
    %1012 = vmatprep.subr.mxu0 0.0
    %1013 = vmatpush1.msra.mxu0 0.0
    %1014 = vmatprep.subr.mxu0 0.0
    %1015 = vmatpush1.msra.mxu0 0.0
    %1016 = vmatprep.subr.mxu0 0.0
    %1017 = vmatpush1.msra.mxu0 0.0
    %1018 = vmatprep.subr.mxu0 0.0
    %1019 = vmatpush1.msra.mxu0 0.0
    %1020 = vmatprep.subr.mxu0 0.0
    %1021 = vmatpush1.msra.mxu0 0.0
    %1022 = vmatprep.subr.mxu0 0.0
    %1023 = vmatpush1.msra.mxu0 0.0
    %1024 = vmatprep.subr.mxu0 0.0
    %1025 = vmatpush1.msra.mxu0 0.0
    %1026 = vmatprep.subr.mxu0 0.0
    %1027 = vmatpush1.msra.mxu0 0.0
    %1028 = vmatprep.subr.mxu0 0.0
    %1029 = vmatpush1.msra.mxu0 0.0
    %1030 = vmatprep.subr.mxu0 0.0
    %1031 = vmatpush1.msra.mxu0 0.0
    %1032 = vmatprep.subr.mxu0 0.0
    %1033 = vmatpush1.msra.mxu0 0.0
    %1034 = vmatprep.subr.mxu0 0.0
    %1035 = vmatpush1.msra.mxu0 0.0
    %1036 = vmatprep.subr.mxu0 0.0
    %1037 = vmatpush1.msra.mxu0 0.0
    %1038 = vmatprep.subr.mxu0 0.0
    %1039 = vmatpush1.msra.mxu0 0.0
    %1040 = vmatprep.subr.mxu0 0.0
    %1041 = vmatpush1.msra.mxu0 0.0
    %1042 = vmatprep.subr.mxu0 0.0
    %1043 = vmatpush1.msra.mxu0 0.0
    %1044 = vmatprep.subr.mxu0 0.0
    %1045 = vmatpush1.msra.mxu0 0.0
    %1046 = vmatprep.subr.mxu0 0.0
    %1047 = vmatpush1.msra.mxu0 0.0
    %1048 = vmatprep.subr.mxu0 0.0
    %1049 = vmatpush1.msra.mxu0 0.0
    %1050 = vmatprep.subr.mxu0 0.0
    %1051 = vmatpush1.msra.mxu0 0.0
    %1052 = vmatprep.subr.mxu0 0.0
    %1053 = vmatpush1.msra.mxu0 0.0
    %1054 = vmatprep.subr.mxu0 0.0
    %1055 = vmatpush1.msra.mxu0 0.0
    %1056 = vmatprep.subr.mxu0 0.0
    %1057 = vmatpush1.msra.mxu0 0.0
    %1058 = vmatprep.mubr.f32.mxu0 0.0
    %1059 = vmatmul.mubr.f32.gmra.mrb[0].mxu0 %v992
    %v1060 = vpop.f32.mrb[0].mxu0
    %v1061 = vadd.f32 0.0, %v1060
    %v1062 = vpop.f32.mrb[0].mxu0
    %1063 = vdwg.mxu0
    %v1065 = vsel %vm296, %v984, 0
    %1067 = vmatprep.subr.mxu0 0.0
    %1068 = vmatpush1.msra.mxu0 %v257
    %1069 = vmatprep.subr.mxu0 0.0
    %1070 = vmatpush1.msra.mxu0 0.0
    %1071 = vmatprep.subr.mxu0 0.0
    %1072 = vmatpush1.msra.mxu0 0.0
    %1073 = vmatprep.subr.mxu0 0.0
    %1074 = vmatpush1.msra.mxu0 0.0
    %1075 = vmatprep.subr.mxu0 0.0
    %1076 = vmatpush1.msra.mxu0 0.0
    %1077 = vmatprep.subr.mxu0 0.0
    %1078 = vmatpush1.msra.mxu0 0.0
    %1079 = vmatprep.subr.mxu0 0.0
    %1080 = vmatpush1.msra.mxu0 0.0
    %1081 = vmatprep.subr.mxu0 0.0
    %1082 = vmatpush1.msra.mxu0 0.0
    %1083 = vmatprep.subr.mxu0 0.0
    %1084 = vmatpush1.msra.mxu0 0.0
    %1085 = vmatprep.subr.mxu0 0.0
    %1086 = vmatpush1.msra.mxu0 0.0
    %1087 = vmatprep.subr.mxu0 0.0
    %1088 = vmatpush1.msra.mxu0 0.0
    %1089 = vmatprep.subr.mxu0 0.0
    %1090 = vmatpush1.msra.mxu0 0.0
    %1091 = vmatprep.subr.mxu0 0.0
    %1092 = vmatpush1.msra.mxu0 0.0
    %1093 = vmatprep.subr.mxu0 0.0
    %1094 = vmatpush1.msra.mxu0 0.0
    %1095 = vmatprep.subr.mxu0 0.0
    %1096 = vmatpush1.msra.mxu0 0.0
    %1097 = vmatprep.subr.mxu0 0.0
    %1098 = vmatpush1.msra.mxu0 0.0
    %1099 = vmatprep.subr.mxu0 0.0
    %1100 = vmatpush1.msra.mxu0 0.0
    %1101 = vmatprep.subr.mxu0 0.0
    %1102 = vmatpush1.msra.mxu0 0.0
    %1103 = vmatprep.subr.mxu0 0.0
    %1104 = vmatpush1.msra.mxu0 0.0
    %1105 = vmatprep.subr.mxu0 0.0
    %1106 = vmatpush1.msra.mxu0 0.0
    %1107 = vmatprep.subr.mxu0 0.0
    %1108 = vmatpush1.msra.mxu0 0.0
    %1109 = vmatprep.subr.mxu0 0.0
    %1110 = vmatpush1.msra.mxu0 0.0
    %1111 = vmatprep.subr.mxu0 0.0
    %1112 = vmatpush1.msra.mxu0 0.0
    %1113 = vmatprep.subr.mxu0 0.0
    %1114 = vmatpush1.msra.mxu0 0.0
    %1115 = vmatprep.subr.mxu0 0.0
    %1116 = vmatpush1.msra.mxu0 0.0
    %1117 = vmatprep.subr.mxu0 0.0
    %1118 = vmatpush1.msra.mxu0 0.0
    %1119 = vmatprep.subr.mxu0 0.0
    %1120 = vmatpush1.msra.mxu0 0.0
    %1121 = vmatprep.subr.mxu0 0.0
    %1122 = vmatpush1.msra.mxu0 0.0
    %1123 = vmatprep.subr.mxu0 0.0
    %1124 = vmatpush1.msra.mxu0 0.0
    %1125 = vmatprep.subr.mxu0 0.0
    %1126 = vmatpush1.msra.mxu0 0.0
    %1127 = vmatprep.subr.mxu0 0.0
    %1128 = vmatpush1.msra.mxu0 0.0
    %1129 = vmatprep.subr.mxu0 0.0
    %1130 = vmatpush1.msra.mxu0 0.0
    %1131 = vmatprep.mubr.f32.mxu0 0.0
    %1132 = vmatmul.mubr.f32.gmra.mrb[0].mxu0 %v1065
    %v1133 = vpop.f32.mrb[0].mxu0
    %v1134 = vadd.f32 0.0, %v1133
    %v1135 = vpop.f32.mrb[0].mxu0
    %1136 = vdwg.mxu0
    %v1138 = vsel %vm296, %v985, 0
    %1140 = vmatprep.subr.mxu0 0.0
    %1141 = vmatpush1.msra.mxu0 %v276
    %1142 = vmatprep.subr.mxu0 0.0
    %1143 = vmatpush1.msra.mxu0 0.0
    %1144 = vmatprep.subr.mxu0 0.0
    %1145 = vmatpush1.msra.mxu0 0.0
    %1146 = vmatprep.subr.mxu0 0.0
    %1147 = vmatpush1.msra.mxu0 0.0
    %1148 = vmatprep.subr.mxu0 0.0
    %1149 = vmatpush1.msra.mxu0 0.0
    %1150 = vmatprep.subr.mxu0 0.0
    %1151 = vmatpush1.msra.mxu0 0.0
    %1152 = vmatprep.subr.mxu0 0.0
    %1153 = vmatpush1.msra.mxu0 0.0
    %1154 = vmatprep.subr.mxu0 0.0
    %1155 = vmatpush1.msra.mxu0 0.0
    %1156 = vmatprep.subr.mxu0 0.0
    %1157 = vmatpush1.msra.mxu0 0.0
    %1158 = vmatprep.subr.mxu0 0.0
    %1159 = vmatpush1.msra.mxu0 0.0
    %1160 = vmatprep.subr.mxu0 0.0
    %1161 = vmatpush1.msra.mxu0 0.0
    %1162 = vmatprep.subr.mxu0 0.0
    %1163 = vmatpush1.msra.mxu0 0.0
    %1164 = vmatprep.subr.mxu0 0.0
    %1165 = vmatpush1.msra.mxu0 0.0
    %1166 = vmatprep.subr.mxu0 0.0
    %1167 = vmatpush1.msra.mxu0 0.0
    %1168 = vmatprep.subr.mxu0 0.0
    %1169 = vmatpush1.msra.mxu0 0.0
    %1170 = vmatprep.subr.mxu0 0.0
    %1171 = vmatpush1.msra.mxu0 0.0
    %1172 = vmatprep.subr.mxu0 0.0
    %1173 = vmatpush1.msra.mxu0 0.0
    %1174 = vmatprep.subr.mxu0 0.0
    %1175 = vmatpush1.msra.mxu0 0.0
    %1176 = vmatprep.subr.mxu0 0.0
    %1177 = vmatpush1.msra.mxu0 0.0
    %1178 = vmatprep.subr.mxu0 0.0
    %1179 = vmatpush1.msra.mxu0 0.0
    %1180 = vmatprep.subr.mxu0 0.0
    %1181 = vmatpush1.msra.mxu0 0.0
    %1182 = vmatprep.subr.mxu0 0.0
    %1183 = vmatpush1.msra.mxu0 0.0
    %1184 = vmatprep.subr.mxu0 0.0
    %1185 = vmatpush1.msra.mxu0 0.0
    %1186 = vmatprep.subr.mxu0 0.0
    %1187 = vmatpush1.msra.mxu0 0.0
    %1188 = vmatprep.subr.mxu0 0.0
    %1189 = vmatpush1.msra.mxu0 0.0
    %1190 = vmatprep.subr.mxu0 0.0
    %1191 = vmatpush1.msra.mxu0 0.0
    %1192 = vmatprep.subr.mxu0 0.0
    %1193 = vmatpush1.msra.mxu0 0.0
    %1194 = vmatprep.subr.mxu0 0.0
    %1195 = vmatpush1.msra.mxu0 0.0
    %1196 = vmatprep.subr.mxu0 0.0
    %1197 = vmatpush1.msra.mxu0 0.0
    %1198 = vmatprep.subr.mxu0 0.0
    %1199 = vmatpush1.msra.mxu0 0.0
    %1200 = vmatprep.subr.mxu0 0.0
    %1201 = vmatpush1.msra.mxu0 0.0
    %1202 = vmatprep.subr.mxu0 0.0
    %1203 = vmatpush1.msra.mxu0 0.0
    %1204 = vmatprep.mubr.f32.mxu0 0.0
    %1205 = vmatmul.mubr.f32.gmra.mrb[0].mxu0 %v1138
    %v1206 = vpop.f32.mrb[0].mxu0
    %v1207 = vadd.f32 0.0, %v1206
    %v1208 = vpop.f32.mrb[0].mxu0
    %1209 = vdwg.mxu0
    %v1211 = vsel %vm296, %v986, 0
    %1213 = vmatprep.subr.mxu0 0.0
    %1214 = vmatpush1.msra.mxu0 %v280
    %1215 = vmatprep.subr.mxu0 0.0
    %1216 = vmatpush1.msra.mxu0 0.0
    %1217 = vmatprep.subr.mxu0 0.0
    %1218 = vmatpush1.msra.mxu0 0.0
    %1219 = vmatprep.subr.mxu0 0.0
    %1220 = vmatpush1.msra.mxu0 0.0
    %1221 = vmatprep.subr.mxu0 0.0
    %1222 = vmatpush1.msra.mxu0 0.0
    %1223 = vmatprep.subr.mxu0 0.0
    %1224 = vmatpush1.msra.mxu0 0.0
    %1225 = vmatprep.subr.mxu0 0.0
    %1226 = vmatpush1.msra.mxu0 0.0
    %1227 = vmatprep.subr.mxu0 0.0
    %1228 = vmatpush1.msra.mxu0 0.0
    %1229 = vmatprep.subr.mxu0 0.0
    %1230 = vmatpush1.msra.mxu0 0.0
    %1231 = vmatprep.subr.mxu0 0.0
    %1232 = vmatpush1.msra.mxu0 0.0
    %1233 = vmatprep.subr.mxu0 0.0
    %1234 = vmatpush1.msra.mxu0 0.0
    %1235 = vmatprep.subr.mxu0 0.0
    %1236 = vmatpush1.msra.mxu0 0.0
    %1237 = vmatprep.subr.mxu0 0.0
    %1238 = vmatpush1.msra.mxu0 0.0
    %1239 = vmatprep.subr.mxu0 0.0
    %1240 = vmatpush1.msra.mxu0 0.0
    %1241 = vmatprep.subr.mxu0 0.0
    %1242 = vmatpush1.msra.mxu0 0.0
    %1243 = vmatprep.subr.mxu0 0.0
    %1244 = vmatpush1.msra.mxu0 0.0
    %1245 = vmatprep.subr.mxu0 0.0
    %1246 = vmatpush1.msra.mxu0 0.0
    %1247 = vmatprep.subr.mxu0 0.0
    %1248 = vmatpush1.msra.mxu0 0.0
    %1249 = vmatprep.subr.mxu0 0.0
    %1250 = vmatpush1.msra.mxu0 0.0
    %1251 = vmatprep.subr.mxu0 0.0
    %1252 = vmatpush1.msra.mxu0 0.0
    %1253 = vmatprep.subr.mxu0 0.0
    %1254 = vmatpush1.msra.mxu0 0.0
    %1255 = vmatprep.subr.mxu0 0.0
    %1256 = vmatpush1.msra.mxu0 0.0
    %1257 = vmatprep.subr.mxu0 0.0
    %1258 = vmatpush1.msra.mxu0 0.0
    %1259 = vmatprep.subr.mxu0 0.0
    %1260 = vmatpush1.msra.mxu0 0.0
    %1261 = vmatprep.subr.mxu0 0.0
    %1262 = vmatpush1.msra.mxu0 0.0
    %1263 = vmatprep.subr.mxu0 0.0
    %1264 = vmatpush1.msra.mxu0 0.0
    %1265 = vmatprep.subr.mxu0 0.0
    %1266 = vmatpush1.msra.mxu0 0.0
    %1267 = vmatprep.subr.mxu0 0.0
    %1268 = vmatpush1.msra.mxu0 0.0
    %1269 = vmatprep.subr.mxu0 0.0
    %1270 = vmatpush1.msra.mxu0 0.0
    %1271 = vmatprep.subr.mxu0 0.0
    %1272 = vmatpush1.msra.mxu0 0.0
    %1273 = vmatprep.subr.mxu0 0.0
    %1274 = vmatpush1.msra.mxu0 0.0
    %1275 = vmatprep.subr.mxu0 0.0
    %1276 = vmatpush1.msra.mxu0 0.0
    %1277 = vmatprep.mubr.f32.mxu0 0.0
    %1278 = vmatmul.mubr.f32.gmra.mrb[0].mxu0 %v1211
    %v1279 = vpop.f32.mrb[0].mxu0
    %v1280 = vadd.f32 0.0, %v1279
    %v1281 = vpop.f32.mrb[0].mxu0
    %1282 = vdwg.mxu0
    %v1284 = vsel %vm296, %v987, 0
    %1286 = vmatprep.subr.mxu0 0.0
    %1287 = vmatpush1.msra.mxu0 %v283
    %1288 = vmatprep.subr.mxu0 0.0
    %1289 = vmatpush1.msra.mxu0 0.0
    %1290 = vmatprep.subr.mxu0 0.0
    %1291 = vmatpush1.msra.mxu0 0.0
    %1292 = vmatprep.subr.mxu0 0.0
    %1293 = vmatpush1.msra.mxu0 0.0
    %1294 = vmatprep.subr.mxu0 0.0
    %1295 = vmatpush1.msra.mxu0 0.0
    %1296 = vmatprep.subr.mxu0 0.0
    %1297 = vmatpush1.msra.mxu0 0.0
    %1298 = vmatprep.subr.mxu0 0.0
    %1299 = vmatpush1.msra.mxu0 0.0
    %1300 = vmatprep.subr.mxu0 0.0
    %1301 = vmatpush1.msra.mxu0 0.0
    %1302 = vmatprep.subr.mxu0 0.0
    %1303 = vmatpush1.msra.mxu0 0.0
    %1304 = vmatprep.subr.mxu0 0.0
    %1305 = vmatpush1.msra.mxu0 0.0
    %1306 = vmatprep.subr.mxu0 0.0
    %1307 = vmatpush1.msra.mxu0 0.0
    %1308 = vmatprep.subr.mxu0 0.0
    %1309 = vmatpush1.msra.mxu0 0.0
    %1310 = vmatprep.subr.mxu0 0.0
    %1311 = vmatpush1.msra.mxu0 0.0
    %1312 = vmatprep.subr.mxu0 0.0
    %1313 = vmatpush1.msra.mxu0 0.0
    %1314 = vmatprep.subr.mxu0 0.0
    %1315 = vmatpush1.msra.mxu0 0.0
    %1316 = vmatprep.subr.mxu0 0.0
    %1317 = vmatpush1.msra.mxu0 0.0
    %1318 = vmatprep.subr.mxu0 0.0
    %1319 = vmatpush1.msra.mxu0 0.0
    %1320 = vmatprep.subr.mxu0 0.0
    %1321 = vmatpush1.msra.mxu0 0.0
    %1322 = vmatprep.subr.mxu0 0.0
    %1323 = vmatpush1.msra.mxu0 0.0
    %1324 = vmatprep.subr.mxu0 0.0
    %1325 = vmatpush1.msra.mxu0 0.0
    %1326 = vmatprep.subr.mxu0 0.0
    %1327 = vmatpush1.msra.mxu0 0.0
    %1328 = vmatprep.subr.mxu0 0.0
    %1329 = vmatpush1.msra.mxu0 0.0
    %1330 = vmatprep.subr.mxu0 0.0
    %1331 = vmatpush1.msra.mxu0 0.0
    %1332 = vmatprep.subr.mxu0 0.0
    %1333 = vmatpush1.msra.mxu0 0.0
    %1334 = vmatprep.subr.mxu0 0.0
    %1335 = vmatpush1.msra.mxu0 0.0
    %1336 = vmatprep.subr.mxu0 0.0
    %1337 = vmatpush1.msra.mxu0 0.0
    %1338 = vmatprep.subr.mxu0 0.0
    %1339 = vmatpush1.msra.mxu0 0.0
    %1340 = vmatprep.subr.mxu0 0.0
    %1341 = vmatpush1.msra.mxu0 0.0
    %1342 = vmatprep.subr.mxu0 0.0
    %1343 = vmatpush1.msra.mxu0 0.0
    %1344 = vmatprep.subr.mxu0 0.0
    %1345 = vmatpush1.msra.mxu0 0.0
    %1346 = vmatprep.subr.mxu0 0.0
    %1347 = vmatpush1.msra.mxu0 0.0
    %1348 = vmatprep.subr.mxu0 0.0
    %1349 = vmatpush1.msra.mxu0 0.0
    %1350 = vmatprep.mubr.f32.mxu0 0.0
    %1351 = vmatmul.mubr.f32.gmra.mrb[0].mxu0 %v1284
    %v1352 = vpop.f32.mrb[0].mxu0
    %v1353 = vadd.f32 0.0, %v1352
    %v1354 = vpop.f32.mrb[0].mxu0
    %1355 = vdwg.mxu0
    %v1357 = vsel %vm296, %v988, 0
    %1359 = vmatprep.subr.mxu0 0.0
    %1360 = vmatpush1.msra.mxu0 %v286
    %1361 = vmatprep.subr.mxu0 0.0
    %1362 = vmatpush1.msra.mxu0 0.0
    %1363 = vmatprep.subr.mxu0 0.0
    %1364 = vmatpush1.msra.mxu0 0.0
    %1365 = vmatprep.subr.mxu0 0.0
    %1366 = vmatpush1.msra.mxu0 0.0
    %1367 = vmatprep.subr.mxu0 0.0
    %1368 = vmatpush1.msra.mxu0 0.0
    %1369 = vmatprep.subr.mxu0 0.0
    %1370 = vmatpush1.msra.mxu0 0.0
    %1371 = vmatprep.subr.mxu0 0.0
    %1372 = vmatpush1.msra.mxu0 0.0
    %1373 = vmatprep.subr.mxu0 0.0
    %1374 = vmatpush1.msra.mxu0 0.0
    %1375 = vmatprep.subr.mxu0 0.0
    %1376 = vmatpush1.msra.mxu0 0.0
    %1377 = vmatprep.subr.mxu0 0.0
    %1378 = vmatpush1.msra.mxu0 0.0
    %1379 = vmatprep.subr.mxu0 0.0
    %1380 = vmatpush1.msra.mxu0 0.0
    %1381 = vmatprep.subr.mxu0 0.0
    %1382 = vmatpush1.msra.mxu0 0.0
    %1383 = vmatprep.subr.mxu0 0.0
    %1384 = vmatpush1.msra.mxu0 0.0
    %1385 = vmatprep.subr.mxu0 0.0
    %1386 = vmatpush1.msra.mxu0 0.0
    %1387 = vmatprep.subr.mxu0 0.0
    %1388 = vmatpush1.msra.mxu0 0.0
    %1389 = vmatprep.subr.mxu0 0.0
    %1390 = vmatpush1.msra.mxu0 0.0
    %1391 = vmatprep.subr.mxu0 0.0
    %1392 = vmatpush1.msra.mxu0 0.0
    %1393 = vmatprep.subr.mxu0 0.0
    %1394 = vmatpush1.msra.mxu0 0.0
    %1395 = vmatprep.subr.mxu0 0.0
    %1396 = vmatpush1.msra.mxu0 0.0
    %1397 = vmatprep.subr.mxu0 0.0
    %1398 = vmatpush1.msra.mxu0 0.0
    %1399 = vmatprep.subr.mxu0 0.0
    %1400 = vmatpush1.msra.mxu0 0.0
    %1401 = vmatprep.subr.mxu0 0.0
    %1402 = vmatpush1.msra.mxu0 0.0
    %1403 = vmatprep.subr.mxu0 0.0
    %1404 = vmatpush1.msra.mxu0 0.0
    %1405 = vmatprep.subr.mxu0 0.0
    %1406 = vmatpush1.msra.mxu0 0.0
    %1407 = vmatprep.subr.mxu0 0.0
    %1408 = vmatpush1.msra.mxu0 0.0
    %1409 = vmatprep.subr.mxu0 0.0
    %1410 = vmatpush1.msra.mxu0 0.0
    %1411 = vmatprep.subr.mxu0 0.0
    %1412 = vmatpush1.msra.mxu0 0.0
    %1413 = vmatprep.subr.mxu0 0.0
    %1414 = vmatpush1.msra.mxu0 0.0
    %1415 = vmatprep.subr.mxu0 0.0
    %1416 = vmatpush1.msra.mxu0 0.0
    %1417 = vmatprep.subr.mxu0 0.0
    %1418 = vmatpush1.msra.mxu0 0.0
    %1419 = vmatprep.subr.mxu0 0.0
    %1420 = vmatpush1.msra.mxu0 0.0
    %1421 = vmatprep.subr.mxu0 0.0
    %1422 = vmatpush1.msra.mxu0 0.0
    %1423 = vmatprep.mubr.f32.mxu0 0.0
    %1424 = vmatmul.mubr.f32.gmra.mrb[0].mxu0 %v1357
    %v1425 = vpop.f32.mrb[0].mxu0
    %v1426 = vadd.f32 0.0, %v1425
    %v1427 = vpop.f32.mrb[0].mxu0
    %1428 = vdwg.mxu0
    %v1430 = vsel %vm296, %v989, 0
    %1432 = vmatprep.subr.mxu0 0.0
    %1433 = vmatpush1.msra.mxu0 %v289
    %1434 = vmatprep.subr.mxu0 0.0
    %1435 = vmatpush1.msra.mxu0 0.0
    %1436 = vmatprep.subr.mxu0 0.0
    %1437 = vmatpush1.msra.mxu0 0.0
    %1438 = vmatprep.subr.mxu0 0.0
    %1439 = vmatpush1.msra.mxu0 0.0
    %1440 = vmatprep.subr.mxu0 0.0
    %1441 = vmatpush1.msra.mxu0 0.0
    %1442 = vmatprep.subr.mxu0 0.0
    %1443 = vmatpush1.msra.mxu0 0.0
    %1444 = vmatprep.subr.mxu0 0.0
    %1445 = vmatpush1.msra.mxu0 0.0
    %1446 = vmatprep.subr.mxu0 0.0
    %1447 = vmatpush1.msra.mxu0 0.0
    %1448 = vmatprep.subr.mxu0 0.0
    %1449 = vmatpush1.msra.mxu0 0.0
    %1450 = vmatprep.subr.mxu0 0.0
    %1451 = vmatpush1.msra.mxu0 0.0
    %1452 = vmatprep.subr.mxu0 0.0
    %1453 = vmatpush1.msra.mxu0 0.0
    %1454 = vmatprep.subr.mxu0 0.0
    %1455 = vmatpush1.msra.mxu0 0.0
    %1456 = vmatprep.subr.mxu0 0.0
    %1457 = vmatpush1.msra.mxu0 0.0
    %1458 = vmatprep.subr.mxu0 0.0
    %1459 = vmatpush1.msra.mxu0 0.0
    %1460 = vmatprep.subr.mxu0 0.0
    %1461 = vmatpush1.msra.mxu0 0.0
    %1462 = vmatprep.subr.mxu0 0.0
    %1463 = vmatpush1.msra.mxu0 0.0
    %1464 = vmatprep.subr.mxu0 0.0
    %1465 = vmatpush1.msra.mxu0 0.0
    %1466 = vmatprep.subr.mxu0 0.0
    %1467 = vmatpush1.msra.mxu0 0.0
    %1468 = vmatprep.subr.mxu0 0.0
    %1469 = vmatpush1.msra.mxu0 0.0
    %1470 = vmatprep.subr.mxu0 0.0
    %1471 = vmatpush1.msra.mxu0 0.0
    %1472 = vmatprep.subr.mxu0 0.0
    %1473 = vmatpush1.msra.mxu0 0.0
    %1474 = vmatprep.subr.mxu0 0.0
    %1475 = vmatpush1.msra.mxu0 0.0
    %1476 = vmatprep.subr.mxu0 0.0
    %1477 = vmatpush1.msra.mxu0 0.0
    %1478 = vmatprep.subr.mxu0 0.0
    %1479 = vmatpush1.msra.mxu0 0.0
    %1480 = vmatprep.subr.mxu0 0.0
    %1481 = vmatpush1.msra.mxu0 0.0
    %1482 = vmatprep.subr.mxu0 0.0
    %1483 = vmatpush1.msra.mxu0 0.0
    %1484 = vmatprep.subr.mxu0 0.0
    %1485 = vmatpush1.msra.mxu0 0.0
    %1486 = vmatprep.subr.mxu0 0.0
    %1487 = vmatpush1.msra.mxu0 0.0
    %1488 = vmatprep.subr.mxu0 0.0
    %1489 = vmatpush1.msra.mxu0 0.0
    %1490 = vmatprep.subr.mxu0 0.0
    %1491 = vmatpush1.msra.mxu0 0.0
    %1492 = vmatprep.subr.mxu0 0.0
    %1493 = vmatpush1.msra.mxu0 0.0
    %1494 = vmatprep.subr.mxu0 0.0
    %1495 = vmatpush1.msra.mxu0 0.0
    %1496 = vmatprep.mubr.f32.mxu0 0.0
    %1497 = vmatmul.mubr.f32.gmra.mrb[0].mxu0 %v1430
    %v1498 = vpop.f32.mrb[0].mxu0
    %v1499 = vadd.f32 0.0, %v1498
    %v1500 = vpop.f32.mrb[0].mxu0
    %1501 = vdwg.mxu0
    %v1503 = vsel %vm296, %v990, 0
    %1505 = vmatprep.subr.mxu0 0.0
    %1506 = vmatpush1.msra.mxu0 %v292
    %1507 = vmatprep.subr.mxu0 0.0
    %1508 = vmatpush1.msra.mxu0 0.0
    %1509 = vmatprep.subr.mxu0 0.0
    %1510 = vmatpush1.msra.mxu0 0.0
    %1511 = vmatprep.subr.mxu0 0.0
    %1512 = vmatpush1.msra.mxu0 0.0
    %1513 = vmatprep.subr.mxu0 0.0
    %1514 = vmatpush1.msra.mxu0 0.0
    %1515 = vmatprep.subr.mxu0 0.0
    %1516 = vmatpush1.msra.mxu0 0.0
    %1517 = vmatprep.subr.mxu0 0.0
    %1518 = vmatpush1.msra.mxu0 0.0
    %1519 = vmatprep.subr.mxu0 0.0
    %1520 = vmatpush1.msra.mxu0 0.0
    %1521 = vmatprep.subr.mxu0 0.0
    %1522 = vmatpush1.msra.mxu0 0.0
    %1523 = vmatprep.subr.mxu0 0.0
    %1524 = vmatpush1.msra.mxu0 0.0
    %1525 = vmatprep.subr.mxu0 0.0
    %1526 = vmatpush1.msra.mxu0 0.0
    %1527 = vmatprep.subr.mxu0 0.0
    %1528 = vmatpush1.msra.mxu0 0.0
    %1529 = vmatprep.subr.mxu0 0.0
    %1530 = vmatpush1.msra.mxu0 0.0
    %1531 = vmatprep.subr.mxu0 0.0
    %1532 = vmatpush1.msra.mxu0 0.0
    %1533 = vmatprep.subr.mxu0 0.0
    %1534 = vmatpush1.msra.mxu0 0.0
    %1535 = vmatprep.subr.mxu0 0.0
    %1536 = vmatpush1.msra.mxu0 0.0
    %1537 = vmatprep.subr.mxu0 0.0
    %1538 = vmatpush1.msra.mxu0 0.0
    %1539 = vmatprep.subr.mxu0 0.0
    %1540 = vmatpush1.msra.mxu0 0.0
    %1541 = vmatprep.subr.mxu0 0.0
    %1542 = vmatpush1.msra.mxu0 0.0
    %1543 = vmatprep.subr.mxu0 0.0
    %1544 = vmatpush1.msra.mxu0 0.0
    %1545 = vmatprep.subr.mxu0 0.0
    %1546 = vmatpush1.msra.mxu0 0.0
    %1547 = vmatprep.subr.mxu0 0.0
    %1548 = vmatpush1.msra.mxu0 0.0
    %1549 = vmatprep.subr.mxu0 0.0
    %1550 = vmatpush1.msra.mxu0 0.0
    %1551 = vmatprep.subr.mxu0 0.0
    %1552 = vmatpush1.msra.mxu0 0.0
    %1553 = vmatprep.subr.mxu0 0.0
    %1554 = vmatpush1.msra.mxu0 0.0
    %1555 = vmatprep.subr.mxu0 0.0
    %1556 = vmatpush1.msra.mxu0 0.0
    %1557 = vmatprep.subr.mxu0 0.0
    %1558 = vmatpush1.msra.mxu0 0.0
    %1559 = vmatprep.subr.mxu0 0.0
    %1560 = vmatpush1.msra.mxu0 0.0
    %1561 = vmatprep.subr.mxu0 0.0
    %1562 = vmatpush1.msra.mxu0 0.0
    %1563 = vmatprep.subr.mxu0 0.0
    %1564 = vmatpush1.msra.mxu0 0.0
    %1565 = vmatprep.subr.mxu0 0.0
    %1566 = vmatpush1.msra.mxu0 0.0
    %1567 = vmatprep.subr.mxu0 0.0
    %1568 = vmatpush1.msra.mxu0 0.0
    %1569 = vmatprep.mubr.f32.mxu0 0.0
    %1570 = vmatmul.mubr.f32.gmra.mrb[0].mxu0 %v1503
    %v1571 = vpop.f32.mrb[0].mxu0
    %v1572 = vadd.f32 0.0, %v1571
    %v1573 = vpop.f32.mrb[0].mxu0
    %1574 = vdwg.mxu0
    %v1575 = vld [vmem:[%s3] sm:$0xff]
    %v1576 = vld [vmem:[%s3 + $0x8] sm:$0xff]
    %v1578 = vsel %vm296, %v1207, 0
    %v1581 = vsel %vm296, %v1280, 0
    %1583 = vmatprep.subr.mxu0 0.0
    %1584 = vmatpush1.msra.mxu0 %v1576
    %1585 = vmatprep.subr.mxu0 0.0
    %1586 = vmatpush1.msra.mxu0 0.0
    %1587 = vmatprep.subr.mxu0 0.0
    %1588 = vmatpush1.msra.mxu0 0.0
    %1589 = vmatprep.subr.mxu0 0.0
    %1590 = vmatpush1.msra.mxu0 0.0
    %1591 = vmatprep.subr.mxu0 0.0
    %1592 = vmatpush1.msra.mxu0 0.0
    %1593 = vmatprep.subr.mxu0 0.0
    %1594 = vmatpush1.msra.mxu0 0.0
    %1595 = vmatprep.subr.mxu0 0.0
    %1596 = vmatpush1.msra.mxu0 0.0
    %1597 = vmatprep.subr.mxu0 0.0
    %1598 = vmatpush1.msra.mxu0 0.0
    %1599 = vmatprep.subr.mxu0 0.0
    %1600 = vmatpush1.msra.mxu0 0.0
    %1601 = vmatprep.subr.mxu0 0.0
    %1602 = vmatpush1.msra.mxu0 0.0
    %1603 = vmatprep.subr.mxu0 0.0
    %1604 = vmatpush1.msra.mxu0 0.0
    %1605 = vmatprep.subr.mxu0 0.0
    %1606 = vmatpush1.msra.mxu0 0.0
    %1607 = vmatprep.subr.mxu0 0.0
    %1608 = vmatpush1.msra.mxu0 0.0
    %1609 = vmatprep.subr.mxu0 0.0
    %1610 = vmatpush1.msra.mxu0 0.0
    %1611 = vmatprep.subr.mxu0 0.0
    %1612 = vmatpush1.msra.mxu0 0.0
    %1613 = vmatprep.subr.mxu0 0.0
    %1614 = vmatpush1.msra.mxu0 0.0
    %1615 = vmatprep.subr.mxu0 0.0
    %1616 = vmatpush1.msra.mxu0 0.0
    %1617 = vmatprep.subr.mxu0 0.0
    %1618 = vmatpush1.msra.mxu0 0.0
    %1619 = vmatprep.subr.mxu0 0.0
    %1620 = vmatpush1.msra.mxu0 0.0
    %1621 = vmatprep.subr.mxu0 0.0
    %1622 = vmatpush1.msra.mxu0 0.0
    %1623 = vmatprep.subr.mxu0 0.0
    %1624 = vmatpush1.msra.mxu0 0.0
    %1625 = vmatprep.subr.mxu0 0.0
    %1626 = vmatpush1.msra.mxu0 0.0
    %1627 = vmatprep.subr.mxu0 0.0
    %1628 = vmatpush1.msra.mxu0 0.0
    %1629 = vmatprep.subr.mxu0 0.0
    %1630 = vmatpush1.msra.mxu0 0.0
    %1631 = vmatprep.subr.mxu0 0.0
    %1632 = vmatpush1.msra.mxu0 0.0
    %1633 = vmatprep.subr.mxu0 0.0
    %1634 = vmatpush1.msra.mxu0 0.0
    %1635 = vmatprep.subr.mxu0 0.0
    %1636 = vmatpush1.msra.mxu0 0.0
    %1637 = vmatprep.subr.mxu0 0.0
    %1638 = vmatpush1.msra.mxu0 0.0
    %1639 = vmatprep.subr.mxu0 0.0
    %1640 = vmatpush1.msra.mxu0 0.0
    %1641 = vmatprep.subr.mxu0 0.0
    %1642 = vmatpush1.msra.mxu0 0.0
    %1643 = vmatprep.subr.mxu0 0.0
    %1644 = vmatpush1.msra.mxu0 0.0
    %1645 = vmatprep.subr.mxu0 0.0
    %1646 = vmatpush1.msra.mxu0 0.0
    %1647 = vmatprep.mubr.f32.mxu0 0.0
    %1648 = vmatmul.mubr.f32.gmra.mrb[0].mxu0 %v1578
    %v1649 = vpop.f32.mrb[0].mxu0
    %v1650 = vadd.f32 0.0, %v1649
    %v1651 = vpop.f32.mrb[0].mxu0
    %1652 = vmatprep.mubr.f32.mxu0 0.0
    %1653 = vmatmul.mubr.f32.gmra.mrb[0].mxu0 %v1581
    %v1654 = vpop.f32.mrb[0].mxu0
    %v1655 = vadd.f32 0.0, %v1654
    %v1656 = vpop.f32.mrb[0].mxu0
    %1657 = vdwg.mxu0
    %v1659 = vsel %vm296, %v1061, 0
    %v1662 = vsel %vm296, %v1134, 0
    %1664 = vmatprep.subr.mxu0 0.0
    %1665 = vmatpush1.msra.mxu0 %v1575
    %1666 = vmatprep.subr.mxu0 0.0
    %1667 = vmatpush1.msra.mxu0 0.0
    %1668 = vmatprep.subr.mxu0 0.0
    %1669 = vmatpush1.msra.mxu0 0.0
    %1670 = vmatprep.subr.mxu0 0.0
    %1671 = vmatpush1.msra.mxu0 0.0
    %1672 = vmatprep.subr.mxu0 0.0
    %1673 = vmatpush1.msra.mxu0 0.0
    %1674 = vmatprep.subr.mxu0 0.0
    %1675 = vmatpush1.msra.mxu0 0.0
    %1676 = vmatprep.subr.mxu0 0.0
    %1677 = vmatpush1.msra.mxu0 0.0
    %1678 = vmatprep.subr.mxu0 0.0
    %1679 = vmatpush1.msra.mxu0 0.0
    %1680 = vmatprep.subr.mxu0 0.0
    %1681 = vmatpush1.msra.mxu0 0.0
    %1682 = vmatprep.subr.mxu0 0.0
    %1683 = vmatpush1.msra.mxu0 0.0
    %1684 = vmatprep.subr.mxu0 0.0
    %1685 = vmatpush1.msra.mxu0 0.0
    %1686 = vmatprep.subr.mxu0 0.0
    %1687 = vmatpush1.msra.mxu0 0.0
    %1688 = vmatprep.subr.mxu0 0.0
    %1689 = vmatpush1.msra.mxu0 0.0
    %1690 = vmatprep.subr.mxu0 0.0
    %1691 = vmatpush1.msra.mxu0 0.0
    %1692 = vmatprep.subr.mxu0 0.0
    %1693 = vmatpush1.msra.mxu0 0.0
    %1694 = vmatprep.subr.mxu0 0.0
    %1695 = vmatpush1.msra.mxu0 0.0
    %1696 = vmatprep.subr.mxu0 0.0
    %1697 = vmatpush1.msra.mxu0 0.0
    %1698 = vmatprep.subr.mxu0 0.0
    %1699 = vmatpush1.msra.mxu0 0.0
    %1700 = vmatprep.subr.mxu0 0.0
    %1701 = vmatpush1.msra.mxu0 0.0
    %1702 = vmatprep.subr.mxu0 0.0
    %1703 = vmatpush1.msra.mxu0 0.0
    %1704 = vmatprep.subr.mxu0 0.0
    %1705 = vmatpush1.msra.mxu0 0.0
    %1706 = vmatprep.subr.mxu0 0.0
    %1707 = vmatpush1.msra.mxu0 0.0
    %1708 = vmatprep.subr.mxu0 0.0
    %1709 = vmatpush1.msra.mxu0 0.0
    %1710 = vmatprep.subr.mxu0 0.0
    %1711 = vmatpush1.msra.mxu0 0.0
    %1712 = vmatprep.subr.mxu0 0.0
    %1713 = vmatpush1.msra.mxu0 0.0
    %1714 = vmatprep.subr.mxu0 0.0
    %1715 = vmatpush1.msra.mxu0 0.0
    %1716 = vmatprep.subr.mxu0 0.0
    %1717 = vmatpush1.msra.mxu0 0.0
    %1718 = vmatprep.subr.mxu0 0.0
    %1719 = vmatpush1.msra.mxu0 0.0
    %1720 = vmatprep.subr.mxu0 0.0
    %1721 = vmatpush1.msra.mxu0 0.0
    %1722 = vmatprep.subr.mxu0 0.0
    %1723 = vmatpush1.msra.mxu0 0.0
    %1724 = vmatprep.subr.mxu0 0.0
    %1725 = vmatpush1.msra.mxu0 0.0
    %1726 = vmatprep.subr.mxu0 0.0
    %1727 = vmatpush1.msra.mxu0 0.0
    %1728 = vmatprep.mubr.f32.mxu0 0.0
    %1729 = vmatmul.mubr.f32.gmra.mrb[0].mxu0 %v1659
    %v1730 = vpop.f32.mrb[0].mxu0
    %v1731 = vadd.f32 %v1650, %v1730
    %v1732 = vpop.f32.mrb[0].mxu0
    %1733 = vmatprep.mubr.f32.mxu0 0.0
    %1734 = vmatmul.mubr.f32.gmra.mrb[0].mxu0 %v1662
    %v1735 = vpop.f32.mrb[0].mxu0
    %v1736 = vadd.f32 %v1655, %v1735
    %v1737 = vpop.f32.mrb[0].mxu0
    %1738 = vdwg.mxu0
    %v1739 = vld [vmem:[%s3 + $0x10] sm:$0xff]
    %v1741 = vsel %vm296, %v1353, 0
    %v1744 = vsel %vm296, %v1426, 0
    %1746 = vmatprep.subr.mxu0 0.0
    %1747 = vmatpush1.msra.mxu0 %v1739
    %1748 = vmatprep.subr.mxu0 0.0
    %1749 = vmatpush1.msra.mxu0 0.0
    %1750 = vmatprep.subr.mxu0 0.0
    %1751 = vmatpush1.msra.mxu0 0.0
    %1752 = vmatprep.subr.mxu0 0.0
    %1753 = vmatpush1.msra.mxu0 0.0
    %1754 = vmatprep.subr.mxu0 0.0
    %1755 = vmatpush1.msra.mxu0 0.0
    %1756 = vmatprep.subr.mxu0 0.0
    %1757 = vmatpush1.msra.mxu0 0.0
    %1758 = vmatprep.subr.mxu0 0.0
    %1759 = vmatpush1.msra.mxu0 0.0
    %1760 = vmatprep.subr.mxu0 0.0
    %1761 = vmatpush1.msra.mxu0 0.0
    %1762 = vmatprep.subr.mxu0 0.0
    %1763 = vmatpush1.msra.mxu0 0.0
    %1764 = vmatprep.subr.mxu0 0.0
    %1765 = vmatpush1.msra.mxu0 0.0
    %1766 = vmatprep.subr.mxu0 0.0
    %1767 = vmatpush1.msra.mxu0 0.0
    %1768 = vmatprep.subr.mxu0 0.0
    %1769 = vmatpush1.msra.mxu0 0.0
    %1770 = vmatprep.subr.mxu0 0.0
    %1771 = vmatpush1.msra.mxu0 0.0
    %1772 = vmatprep.subr.mxu0 0.0
    %1773 = vmatpush1.msra.mxu0 0.0
    %1774 = vmatprep.subr.mxu0 0.0
    %1775 = vmatpush1.msra.mxu0 0.0
    %1776 = vmatprep.subr.mxu0 0.0
    %1777 = vmatpush1.msra.mxu0 0.0
    %1778 = vmatprep.subr.mxu0 0.0
    %1779 = vmatpush1.msra.mxu0 0.0
    %1780 = vmatprep.subr.mxu0 0.0
    %1781 = vmatpush1.msra.mxu0 0.0
    %1782 = vmatprep.subr.mxu0 0.0
    %1783 = vmatpush1.msra.mxu0 0.0
    %1784 = vmatprep.subr.mxu0 0.0
    %1785 = vmatpush1.msra.mxu0 0.0
    %1786 = vmatprep.subr.mxu0 0.0
    %1787 = vmatpush1.msra.mxu0 0.0
    %1788 = vmatprep.subr.mxu0 0.0
    %1789 = vmatpush1.msra.mxu0 0.0
    %1790 = vmatprep.subr.mxu0 0.0
    %1791 = vmatpush1.msra.mxu0 0.0
    %1792 = vmatprep.subr.mxu0 0.0
    %1793 = vmatpush1.msra.mxu0 0.0
    %1794 = vmatprep.subr.mxu0 0.0
    %1795 = vmatpush1.msra.mxu0 0.0
    %1796 = vmatprep.subr.mxu0 0.0
    %1797 = vmatpush1.msra.mxu0 0.0
    %1798 = vmatprep.subr.mxu0 0.0
    %1799 = vmatpush1.msra.mxu0 0.0
    %1800 = vmatprep.subr.mxu0 0.0
    %1801 = vmatpush1.msra.mxu0 0.0
    %1802 = vmatprep.subr.mxu0 0.0
    %1803 = vmatpush1.msra.mxu0 0.0
    %1804 = vmatprep.subr.mxu0 0.0
    %1805 = vmatpush1.msra.mxu0 0.0
    %1806 = vmatprep.subr.mxu0 0.0
    %1807 = vmatpush1.msra.mxu0 0.0
    %1808 = vmatprep.subr.mxu0 0.0
    %1809 = vmatpush1.msra.mxu0 0.0
    %1810 = vmatprep.mubr.f32.mxu0 0.0
    %1811 = vmatmul.mubr.f32.gmra.mrb[0].mxu0 %v1741
    %v1812 = vpop.f32.mrb[0].mxu0
    %v1813 = vadd.f32 0.0, %v1812
    %v1814 = vpop.f32.mrb[0].mxu0
    %1815 = vmatprep.mubr.f32.mxu0 0.0
    %1816 = vmatmul.mubr.f32.gmra.mrb[0].mxu0 %v1744
    %v1817 = vpop.f32.mrb[0].mxu0
    %v1818 = vadd.f32 0.0, %v1817
    %v1819 = vpop.f32.mrb[0].mxu0
    %1820 = vdwg.mxu0
    %v1821 = vadd.f32 %v1731, %v1813
    %v1822 = vadd.f32 %v1736, %v1818
    %v1823 = vld [vmem:[%s3 + $0x18] sm:$0xff]
    %v1825 = vsel %vm296, %v1499, 0
    %v1828 = vsel %vm296, %v1572, 0
    %1830 = vmatprep.subr.mxu0 0.0
    %1831 = vmatpush1.msra.mxu0 %v1823
    %1832 = vmatprep.subr.mxu0 0.0
    %1833 = vmatpush1.msra.mxu0 0.0
    %1834 = vmatprep.subr.mxu0 0.0
    %1835 = vmatpush1.msra.mxu0 0.0
    %1836 = vmatprep.subr.mxu0 0.0
    %1837 = vmatpush1.msra.mxu0 0.0
    %1838 = vmatprep.subr.mxu0 0.0
    %1839 = vmatpush1.msra.mxu0 0.0
    %1840 = vmatprep.subr.mxu0 0.0
    %1841 = vmatpush1.msra.mxu0 0.0
    %1842 = vmatprep.subr.mxu0 0.0
    %1843 = vmatpush1.msra.mxu0 0.0
    %1844 = vmatprep.subr.mxu0 0.0
    %1845 = vmatpush1.msra.mxu0 0.0
    %1846 = vmatprep.subr.mxu0 0.0
    %1847 = vmatpush1.msra.mxu0 0.0
    %1848 = vmatprep.subr.mxu0 0.0
    %1849 = vmatpush1.msra.mxu0 0.0
    %1850 = vmatprep.subr.mxu0 0.0
    %1851 = vmatpush1.msra.mxu0 0.0
    %1852 = vmatprep.subr.mxu0 0.0
    %1853 = vmatpush1.msra.mxu0 0.0
    %1854 = vmatprep.subr.mxu0 0.0
    %1855 = vmatpush1.msra.mxu0 0.0
    %1856 = vmatprep.subr.mxu0 0.0
    %1857 = vmatpush1.msra.mxu0 0.0
    %1858 = vmatprep.subr.mxu0 0.0
    %1859 = vmatpush1.msra.mxu0 0.0
    %1860 = vmatprep.subr.mxu0 0.0
    %1861 = vmatpush1.msra.mxu0 0.0
    %1862 = vmatprep.subr.mxu0 0.0
    %1863 = vmatpush1.msra.mxu0 0.0
    %1864 = vmatprep.subr.mxu0 0.0
    %1865 = vmatpush1.msra.mxu0 0.0
    %1866 = vmatprep.subr.mxu0 0.0
    %1867 = vmatpush1.msra.mxu0 0.0
    %1868 = vmatprep.subr.mxu0 0.0
    %1869 = vmatpush1.msra.mxu0 0.0
    %1870 = vmatprep.subr.mxu0 0.0
    %1871 = vmatpush1.msra.mxu0 0.0
    %1872 = vmatprep.subr.mxu0 0.0
    %1873 = vmatpush1.msra.mxu0 0.0
    %1874 = vmatprep.subr.mxu0 0.0
    %1875 = vmatpush1.msra.mxu0 0.0
    %1876 = vmatprep.subr.mxu0 0.0
    %1877 = vmatpush1.msra.mxu0 0.0
    %1878 = vmatprep.subr.mxu0 0.0
    %1879 = vmatpush1.msra.mxu0 0.0
    %1880 = vmatprep.subr.mxu0 0.0
    %1881 = vmatpush1.msra.mxu0 0.0
    %1882 = vmatprep.subr.mxu0 0.0
    %1883 = vmatpush1.msra.mxu0 0.0
    %1884 = vmatprep.subr.mxu0 0.0
    %1885 = vmatpush1.msra.mxu0 0.0
    %1886 = vmatprep.subr.mxu0 0.0
    %1887 = vmatpush1.msra.mxu0 0.0
    %1888 = vmatprep.subr.mxu0 0.0
    %1889 = vmatpush1.msra.mxu0 0.0
    %1890 = vmatprep.subr.mxu0 0.0
    %1891 = vmatpush1.msra.mxu0 0.0
    %1892 = vmatprep.subr.mxu0 0.0
    %1893 = vmatpush1.msra.mxu0 0.0
    %1894 = vmatprep.mubr.f32.mxu0 0.0
    %1895 = vmatmul.mubr.f32.gmra.mrb[0].mxu0 %v1825
    %v1896 = vpop.f32.mrb[0].mxu0
    %v1897 = vadd.f32 0.0, %v1896
    %v1898 = vpop.f32.mrb[0].mxu0
    %1899 = vmatprep.mubr.f32.mxu0 0.0
    %1900 = vmatmul.mubr.f32.gmra.mrb[0].mxu0 %v1828
    %v1901 = vpop.f32.mrb[0].mxu0
    %v1902 = vadd.f32 0.0, %v1901
    %v1903 = vpop.f32.mrb[0].mxu0
    %1904 = vdwg.mxu0
    %v1905 = vadd.f32 %v1821, %v1897
    %v1906 = vadd.f32 %v1822, %v1902
    %v1907 = vlaneseq
    %v1908 = vshrl.u32 %v1907, 7
    %v1909 = vsub.s32 0, %v1908
    %v1910 = vrot.slane %v56, %v1909
    %v1911 = vadd.f32 %v1905, %v1910
    %v1912 = vadd.f32 %v1906, %v1910
    %v1913 = vadd.f32 %v63, %v1911
    %v1914 = vadd.f32 %v64, %v1912
    %v1915 = vsel %vm77, %v1913, 0.0
    %1916 = vadd.xlane.f32.xlu0 %v1915
    %v1917 = vpop.xlane.xlu0 %1916
    %v1918 = vsel %vm77, %v1914, 0.0
    %1919 = vadd.xlane.f32.xlu0 %v1918
    %v1920 = vpop.xlane.xlu0 %1919
    %v1921 = vrcp.pop 32.0
    %v1922 = vmul.f32 %v1917, %v1921
    %v1923 = vmul.f32 %v1920, %v1921
    %v1924 = vsub.f32 %v1913, %v1922
    %v1925 = vsub.f32 %v1914, %v1923
    %v1926 = vmul.f32 %v1924, %v1924
    %v1927 = vmul.f32 %v1925, %v1925
    %v1928 = vsel %vm77, %v1926, 0.0
    %1929 = vadd.xlane.f32.xlu0 %v1928
    %v1930 = vpop.xlane.xlu0 %1929
    %v1931 = vsel %vm77, %v1927, 0.0
    %1932 = vadd.xlane.f32.xlu0 %v1931
    %v1933 = vpop.xlane.xlu0 %1932
    %v1934 = vmul.f32 %v1930, %v1921
    %v1935 = vmul.f32 %v1933, %v1921
    %v1936 = vadd.f32 %v1934, 1e-05
    %v1937 = vadd.f32 %v1935, 1e-05
    %v1938 = vrsqrt.pop %v1936
    %v1939 = vrsqrt.pop %v1937
    %v1940 = vmul.f32 %v1924, %v1938
    %v1941 = vmul.f32 %v1925, %v1939
    %v1942 = vlaneseq
    %v1943 = vshrl.u32 %v1942, 7
    %v1944 = vsub.s32 0, %v1943
    %v1945 = vrot.slane %v59, %v1944
    %v1946 = vmul.f32 %v1940, %v1945
    %v1947 = vmul.f32 %v1941, %v1945
    %v1948 = vlaneseq
    %v1949 = vshrl.u32 %v1948, 7
    %v1950 = vsub.s32 0, %v1949
    %v1951 = vrot.slane %v60, %v1950
    %v1952 = vadd.f32 %v1946, %v1951
    %v1953 = vadd.f32 %v1947, %v1951
    %v1954 = vld [vmem:[%s4] sm:$0xff]
    %v1955 = vld [vmem:[%s4 + $0x8] sm:$0xff]
    %v1956 = vld [vmem:[%s4 + $0x10] sm:$0xff]
    %v1957 = vld [vmem:[%s4 + $0x18] sm:$0xff]
    %v1958 = vlaneseq
    %v1959 = vshrl.u32 %v1958, 7
    %v1960 = vsub.s32 0, %v1959
    %v1961 = vrot.slane %v57, %v1960
    %v1963 = vsel %vm77, %v1952, 0
    %v1966 = vsel %vm77, %v1953, 0
    %1968 = vmatprep.subr.mxu0 0.0
    %1969 = vmatpush1.msra.mxu0 %v1954
    %1970 = vmatprep.subr.mxu0 0.0
    %1971 = vmatpush1.msra.mxu0 %v1955
    %1972 = vmatprep.subr.mxu0 0.0
    %1973 = vmatpush1.msra.mxu0 %v1956
    %1974 = vmatprep.subr.mxu0 0.0
    %1975 = vmatpush1.msra.mxu0 %v1957
    %1976 = vmatprep.subr.mxu0 0.0
    %1977 = vmatpush1.msra.mxu0 0.0
    %1978 = vmatprep.subr.mxu0 0.0
    %1979 = vmatpush1.msra.mxu0 0.0
    %1980 = vmatprep.subr.mxu0 0.0
    %1981 = vmatpush1.msra.mxu0 0.0
    %1982 = vmatprep.subr.mxu0 0.0
    %1983 = vmatpush1.msra.mxu0 0.0
    %1984 = vmatprep.subr.mxu0 0.0
    %1985 = vmatpush1.msra.mxu0 0.0
    %1986 = vmatprep.subr.mxu0 0.0
    %1987 = vmatpush1.msra.mxu0 0.0
    %1988 = vmatprep.subr.mxu0 0.0
    %1989 = vmatpush1.msra.mxu0 0.0
    %1990 = vmatprep.subr.mxu0 0.0
    %1991 = vmatpush1.msra.mxu0 0.0
    %1992 = vmatprep.subr.mxu0 0.0
    %1993 = vmatpush1.msra.mxu0 0.0
    %1994 = vmatprep.subr.mxu0 0.0
    %1995 = vmatpush1.msra.mxu0 0.0
    %1996 = vmatprep.subr.mxu0 0.0
    %1997 = vmatpush1.msra.mxu0 0.0
    %1998 = vmatprep.subr.mxu0 0.0
    %1999 = vmatpush1.msra.mxu0 0.0
    %2000 = vmatprep.subr.mxu0 0.0
    %2001 = vmatpush1.msra.mxu0 0.0
    %2002 = vmatprep.subr.mxu0 0.0
    %2003 = vmatpush1.msra.mxu0 0.0
    %2004 = vmatprep.subr.mxu0 0.0
    %2005 = vmatpush1.msra.mxu0 0.0
    %2006 = vmatprep.subr.mxu0 0.0
    %2007 = vmatpush1.msra.mxu0 0.0
    %2008 = vmatprep.subr.mxu0 0.0
    %2009 = vmatpush1.msra.mxu0 0.0
    %2010 = vmatprep.subr.mxu0 0.0
    %2011 = vmatpush1.msra.mxu0 0.0
    %2012 = vmatprep.subr.mxu0 0.0
    %2013 = vmatpush1.msra.mxu0 0.0
    %2014 = vmatprep.subr.mxu0 0.0
    %2015 = vmatpush1.msra.mxu0 0.0
    %2016 = vmatprep.subr.mxu0 0.0
    %2017 = vmatpush1.msra.mxu0 0.0
    %2018 = vmatprep.subr.mxu0 0.0
    %2019 = vmatpush1.msra.mxu0 0.0
    %2020 = vmatprep.subr.mxu0 0.0
    %2021 = vmatpush1.msra.mxu0 0.0
    %2022 = vmatprep.subr.mxu0 0.0
    %2023 = vmatpush1.msra.mxu0 0.0
    %2024 = vmatprep.subr.mxu0 0.0
    %2025 = vmatpush1.msra.mxu0 0.0
    %2026 = vmatprep.subr.mxu0 0.0
    %2027 = vmatpush1.msra.mxu0 0.0
    %2028 = vmatprep.subr.mxu0 0.0
    %2029 = vmatpush1.msra.mxu0 0.0
    %2030 = vmatprep.subr.mxu0 0.0
    %2031 = vmatpush1.msra.mxu0 0.0
    %2032 = vmatprep.mubr.f32.mxu0 0.0
    %2033 = vmatmul.mubr.f32.gmra.mrb[0].mxu0 %v1963
    %v2034 = vpop.f32.mrb[0].mxu0
    %v2035 = vadd.f32 %v1961, %v2034
    %v2036 = vpop.f32.mrb[0].mxu0
    %2037 = vmatprep.mubr.f32.mxu0 0.0
    %2038 = vmatmul.mubr.f32.gmra.mrb[0].mxu0 %v1966
    %v2039 = vpop.f32.mrb[0].mxu0
    %v2040 = vadd.f32 %v1961, %v2039
    %v2041 = vpop.f32.mrb[0].mxu0
    %2042 = vdwg.mxu0
    %v2043 = vmul.f32 %v2035, 0.5
    %v2044 = vmul.f32 %v2040, 0.5
    %v2045 = vmul.f32 %v2035, 0.70710677
    %v2046 = vmul.f32 %v2040, 0.70710677
    %v2047 = verf.f32.pop %v2045
    %v2048 = verf.f32.pop %v2046
    %v2049 = vadd.f32 %v2047, 1.0
    %v2050 = vadd.f32 %v2048, 1.0
    %v2051 = vmul.f32 %v2043, %v2049
    %v2052 = vmul.f32 %v2044, %v2050
    %v2053 = vld [vmem:[%s5] sm:$0xff]
    %v2054 = vld [vmem:[%s5 + $0x8] sm:$0xff]
    %v2055 = vld [vmem:[%s5 + $0x10] sm:$0xff]
    %v2056 = vld [vmem:[%s5 + $0x18] sm:$0xff]
    %v2057 = vld [vmem:[%s5 + $0x20] sm:$0xff]
    %v2058 = vld [vmem:[%s5 + $0x28] sm:$0xff]
    %v2059 = vld [vmem:[%s5 + $0x30] sm:$0xff]
    %v2060 = vld [vmem:[%s5 + $0x38] sm:$0xff]
    %v2061 = vlaneseq
    %v2062 = vshrl.u32 %v2061, 7
    %v2063 = vsub.s32 0, %v2062
    %v2064 = vrot.slane %v58, %v2063
    %vm2065 = vcmask 523264
    %v2067 = vsel %vm2065, %v2051, 0
    %v2070 = vsel %vm2065, %v2052, 0
    %2072 = vmatprep.subr.mxu0 0.0
    %2073 = vmatpush1.msra.mxu0 %v2053
    %2074 = vmatprep.subr.mxu0 0.0
    %2075 = vmatpush1.msra.mxu0 %v2054
    %2076 = vmatprep.subr.mxu0 0.0
    %2077 = vmatpush1.msra.mxu0 %v2055
    %2078 = vmatprep.subr.mxu0 0.0
    %2079 = vmatpush1.msra.mxu0 %v2056
    %2080 = vmatprep.subr.mxu0 0.0
    %2081 = vmatpush1.msra.mxu0 %v2057
    %2082 = vmatprep.subr.mxu0 0.0
    %2083 = vmatpush1.msra.mxu0 %v2058
    %2084 = vmatprep.subr.mxu0 0.0
    %2085 = vmatpush1.msra.mxu0 %v2059
    %2086 = vmatprep.subr.mxu0 0.0
    %2087 = vmatpush1.msra.mxu0 %v2060
    %2088 = vmatprep.subr.mxu0 0.0
    %2089 = vmatpush1.msra.mxu0 0.0
    %2090 = vmatprep.subr.mxu0 0.0
    %2091 = vmatpush1.msra.mxu0 0.0
    %2092 = vmatprep.subr.mxu0 0.0
    %2093 = vmatpush1.msra.mxu0 0.0
    %2094 = vmatprep.subr.mxu0 0.0
    %2095 = vmatpush1.msra.mxu0 0.0
    %2096 = vmatprep.subr.mxu0 0.0
    %2097 = vmatpush1.msra.mxu0 0.0
    %2098 = vmatprep.subr.mxu0 0.0
    %2099 = vmatpush1.msra.mxu0 0.0
    %2100 = vmatprep.subr.mxu0 0.0
    %2101 = vmatpush1.msra.mxu0 0.0
    %2102 = vmatprep.subr.mxu0 0.0
    %2103 = vmatpush1.msra.mxu0 0.0
    %2104 = vmatprep.subr.mxu0 0.0
    %2105 = vmatpush1.msra.mxu0 0.0
    %2106 = vmatprep.subr.mxu0 0.0
    %2107 = vmatpush1.msra.mxu0 0.0
    %2108 = vmatprep.subr.mxu0 0.0
    %2109 = vmatpush1.msra.mxu0 0.0
    %2110 = vmatprep.subr.mxu0 0.0
    %2111 = vmatpush1.msra.mxu0 0.0
    %2112 = vmatprep.subr.mxu0 0.0
    %2113 = vmatpush1.msra.mxu0 0.0
    %2114 = vmatprep.subr.mxu0 0.0
    %2115 = vmatpush1.msra.mxu0 0.0
    %2116 = vmatprep.subr.mxu0 0.0
    %2117 = vmatpush1.msra.mxu0 0.0
    %2118 = vmatprep.subr.mxu0 0.0
    %2119 = vmatpush1.msra.mxu0 0.0
    %2120 = vmatprep.subr.mxu0 0.0
    %2121 = vmatpush1.msra.mxu0 0.0
    %2122 = vmatprep.subr.mxu0 0.0
    %2123 = vmatpush1.msra.mxu0 0.0
    %2124 = vmatprep.subr.mxu0 0.0
    %2125 = vmatpush1.msra.mxu0 0.0
    %2126 = vmatprep.subr.mxu0 0.0
    %2127 = vmatpush1.msra.mxu0 0.0
    %2128 = vmatprep.subr.mxu0 0.0
    %2129 = vmatpush1.msra.mxu0 0.0
    %2130 = vmatprep.subr.mxu0 0.0
    %2131 = vmatpush1.msra.mxu0 0.0
    %2132 = vmatprep.subr.mxu0 0.0
    %2133 = vmatpush1.msra.mxu0 0.0
    %2134 = vmatprep.subr.mxu0 0.0
    %2135 = vmatpush1.msra.mxu0 0.0
    %2136 = vmatprep.mubr.f32.mxu0 0.0
    %2137 = vmatmul.mubr.f32.gmra.mrb[0].mxu0 %v2067
    %v2138 = vpop.f32.mrb[0].mxu0
    %v2139 = vadd.f32 %v2064, %v2138
    %v2140 = vpop.f32.mrb[0].mxu0
    %2141 = vmatprep.mubr.f32.mxu0 0.0
    %2142 = vmatmul.mubr.f32.gmra.mrb[0].mxu0 %v2070
    %v2143 = vpop.f32.mrb[0].mxu0
    %v2144 = vadd.f32 %v2064, %v2143
    %v2145 = vpop.f32.mrb[0].mxu0
    %2146 = vdwg.mxu0
    %v2147 = vadd.f32 %v1952, %v2139
    %v2148 = vadd.f32 %v1953, %v2144
    %v2149 = vsel %vm77, %v2147, 0.0
    %2150 = vadd.xlane.f32.xlu0 %v2149
    %v2151 = vpop.xlane.xlu0 %2150
    %v2152 = vsel %vm77, %v2148, 0.0
    %2153 = vadd.xlane.f32.xlu0 %v2152
    %v2154 = vpop.xlane.xlu0 %2153
    %v2155 = vmul.f32 %v2151, %v1921
    %v2156 = vmul.f32 %v2154, %v1921
    %v2157 = vsub.f32 %v2147, %v2155
    %v2158 = vsub.f32 %v2148, %v2156
    %v2159 = vmul.f32 %v2157, %v2157
    %v2160 = vmul.f32 %v2158, %v2158
    %v2161 = vsel %vm77, %v2159, 0.0
    %2162 = vadd.xlane.f32.xlu0 %v2161
    %v2163 = vpop.xlane.xlu0 %2162
    %v2164 = vsel %vm77, %v2160, 0.0
    %2165 = vadd.xlane.f32.xlu0 %v2164
    %v2166 = vpop.xlane.xlu0 %2165
    %v2167 = vmul.f32 %v2163, %v1921
    %v2168 = vmul.f32 %v2166, %v1921
    %v2169 = vadd.f32 %v2167, 1e-05
    %v2170 = vadd.f32 %v2168, 1e-05
    %v2171 = vrsqrt.pop %v2169
    %v2172 = vrsqrt.pop %v2170
    %v2173 = vmul.f32 %v2157, %v2171
    %v2174 = vmul.f32 %v2158, %v2172
    %v2175 = vlaneseq
    %v2176 = vshrl.u32 %v2175, 7
    %v2177 = vsub.s32 0, %v2176
    %v2178 = vrot.slane %v61, %v2177
    %v2179 = vmul.f32 %v2173, %v2178
    %v2180 = vmul.f32 %v2174, %v2178
    %v2181 = vlaneseq
    %v2182 = vshrl.u32 %v2181, 7
    %v2183 = vsub.s32 0, %v2182
    %v2184 = vrot.slane %v62, %v2183
    %v2185 = vadd.f32 %v2179, %v2184
    %v2186 = vadd.f32 %v2180, %v2184
    %2187 = vst.msk [vmem:[#allocation7] sm:$0xff] %vm77, %v2185
    %2188 = vst.msk [vmem:[#allocation7 + $0x8] sm:$0xff] %vm77, %v2186
    // Predicated region
    $region38: #{tpu_custom_call.1} parent=1 // pred_check
      _
    $region39: #{tpu_custom_call.1} parent=1 // pred_check_branch
      %2190 = sbr.rel (0) target = $region41
    $region40: #{tpu_custom_call.1} parent=1 // pred_region
      %s2192 = ssub.s32 256, 256
      %2193 = vsyncadd [#allocation4], %s2192
      %s2194 = sshll.u32 [#allocation7], 4
      %s2195 = int_to_ptr.vmem [resolvable:$true] %s2194
      %2200 = dma.vmem_to_hbm [thread:$0]  %s2195, 256, %s7, [#allocation4], 128, 128, 8
    $region41: #{tpu_custom_call.1} parent=1 // pred_fallthru
      _
    // Predicated region
    $region42: #{tpu_custom_call.1} parent=1 // pred_check
      _
    $region43: #{tpu_custom_call.1} parent=1 // pred_check_branch
      %2202 = sbr.rel (0) target = $region45
    $region44: #{tpu_custom_call.1} parent=1 // pred_region
      %2203 = dma.done [#allocation4], 256
    $region45: #{tpu_custom_call.1} parent=1 // pred_fallthru
      _
    %2204 = vsyncpa [#allocation3], 1
    %2205 = vsyncpa [#allocation6], 1
    %2206 = vsyncpa [#allocation4], 1

</llo_original>
